<compile_context>
chip_gen: v6e
topology: v6e:2x2x1
jax: 0.10.0
libtpu: 0.0.40
codegen_flags: <defaults>
</compile_context>

<pallas_src>
import functools

import numpy as np
import jax
import jax.numpy as jnp
from jax.experimental import pallas as pl
from jax.experimental.pallas import tpu as pltpu


def _round_up(x, m):
    return ((x + m - 1) // m) * m


def _adaptive_bins(c_in, c_out):
    """Static bin boundaries of PyTorch AdaptiveMax/AvgPool1d (length c_in -> c_out)."""
    return [((i * c_in) // c_out, ((i + 1) * c_in + c_out - 1) // c_out)
            for i in range(c_out)]


# ---------------- kernel 1: adaptive max/avg pool over channels + concat ---------------- #
def _pool_concat_kernel(x_ref, amat_ref, o_ref, *, bins):
    """x_ref: (TILE_M, C) rows of inp.reshape(-1, C); amat_ref: (C, Cr) averaging matrix.

    o_ref: (TILE_M, 2*Cr) with [:, :Cr] = adaptive max bins, [:, Cr:] = adaptive avg bins
    (matches torch.cat([maxPool, avgPool], dim=-1)).
    """
    x = x_ref[...]
    # all avg bins at once on the MXU
    av = jnp.dot(x, amat_ref[...], preferred_element_type=jnp.float32)
    # max bins: static contiguous lane slices + lane reductions (XLU)
    mxs = [jnp.max(x[:, s:e], axis=1, keepdims=True) for (s, e) in bins]
    o_ref[...] = jnp.concatenate(mxs + [av], axis=1)


# -------- kernel 2: fused conv1(3x3) + bias + ReLU + conv2(3x3) + bias + sigmoid -------- #
def _fused_conv_kernel(a_ref, w1_ref, b1_ref, w2_ref, b2_ref, o_ref, *, W, Wp, L2):
    """One image per grid step, lane-major layout (channels on sublanes, spatial on lanes).

    a_ref : (1, C2P, LPAD)  ring-padded image; lanes are the row-major flattening of the
                            (H+3, W+2) padded grid (1 extra bottom row for tap overrun);
                            channels padded with zeros up to C2P (multiple of 8).
    w1_ref: (CRP, 9*C2P)    column t*C2P+ci  == torch.conv1.weight[co, ci, t//3, t%3]
    b1_ref: (CRP, 1)
    w2_ref: (8, 9*CRP)      row 0, column t*CRP+ci == torch.conv2.weight[0, ci, t//3, t%3]
    b2_ref: (1, 1)
    o_ref : (1, 1, L2)      sigmoid(conv2(relu(conv1(x)))) at flattened positions
                            l = h*(W+2)+w; columns w >= W are wrap junk (dropped by caller).
    """
    a = a_ref[0]                                             # (C2P, LPAD) value
    crp = w1_ref.shape[0]
    taps = [dh * Wp + dw for dh in range(3) for dw in range(3)]

    # conv1: one matmul over an in-register im2col (taps are lane shifts)
    im1 = jnp.concatenate([a[:, s:s + L2] for s in taps], axis=0)        # (9*C2P, L2)
    h1 = jnp.dot(w1_ref[...], im1, preferred_element_type=jnp.float32) + b1_ref[...]
    h1 = jnp.maximum(h1, 0.0)

    # zero the 2 wrap-around junk columns of every spatial row so that, after the
    # (Wp+1)-lane shift below, they become exactly conv2's zero-padding ring.
    lane = jax.lax.broadcasted_iota(jnp.int32, h1.shape, 1)
    h1 = jnp.where(lane % Wp < W, h1, 0.0)

    # shift by Wp+1 lanes (top pad row + left pad col) == re-pad relu(conv1) for conv2
    zpad = jnp.zeros((crp, Wp + 1), jnp.float32)
    h1p = jnp.concatenate([zpad, h1, zpad], axis=1)                      # (CRP, L2 + 2*(Wp+1))

    # conv2: one matmul over the second im2col; result row 0 is the single out channel.
    im2 = jnp.concatenate([h1p[:, s:s + L2] for s in taps], axis=0)      # (9*CRP, L2)
    res = jnp.dot(w2_ref[...], im2, preferred_element_type=jnp.float32)  # (8, L2)
    out = res[0:1, :] + b2_ref[...]
    o_ref[0] = jax.nn.sigmoid(out)                                       # lane-dense (1, L2)


# ----------------------------------- wrapper ----------------------------------- #
def init_params(key, in_channels, reduce_factor=5):
    cr = in_channels // reduce_factor
    c2 = 2 * cr
    k1, k2, k3, k4 = jax.random.split(key, 4)
    return {
        # tap-major conv weights: w[t, ci, co] == torch_conv.weight[co, ci, t//3, t%3]
        "w1": (0.3 * jax.random.normal(k1, (9, c2, cr))).astype(jnp.float32),
        "b1": (0.1 * jax.random.normal(k2, (1, cr))).astype(jnp.float32),
        "w2": (0.3 * jax.random.normal(k3, (9, cr, 1))).astype(jnp.float32),
        "b2": (0.1 * jax.random.normal(k4, (1, 1))).astype(jnp.float32),
    }


def _prep_conv_weights(params):
    """Repack tap-major weights into the lane-major matmul layouts (8-aligned channels)."""
    w1, b1, w2, b2 = params["w1"], params["b1"], params["w2"], params["b2"]
    _, c2, cr = w1.shape
    c2p = _round_up(c2, 8)
    crp = _round_up(cr, 8)
    # conv1: (CRP, 9*C2P), rows = out channel, cols = t*C2P + ci
    w1m = jnp.zeros((crp, 9, c2p), jnp.float32)
    w1m = w1m.at[:cr, :, :c2].set(jnp.transpose(w1, (2, 0, 1)))
    w1m = w1m.reshape(crp, 9 * c2p)
    b1m = jnp.zeros((crp, 1), jnp.float32).at[:cr, 0].set(b1[0])
    # conv2: (8, 9*CRP), only row 0 (single out channel) is non-zero
    w2m = jnp.zeros((8, 9, crp), jnp.float32)
    w2m = w2m.at[0, :, :cr].set(jnp.transpose(w2, (2, 0, 1))[0])
    w2m = w2m.reshape(8, 9 * crp)
    b2m = b2.reshape(1, 1)
    return w1m, b1m, w2m, b2m, c2p, crp


@functools.partial(jax.jit, static_argnames=("reduce_factor",))
def spatial_attention_forward(x_nchw, params, reduce_factor=5):
    x = x_nchw.astype(jnp.float32)
    N, C, H, W = x.shape
    cr = C // reduce_factor
    c2 = 2 * cr
    bins = _adaptive_bins(C, cr)
    assert cr >= 1 and all(e > s for s, e in bins), "empty adaptive-pool bin"

    cparams = pltpu.CompilerParams(dimension_semantics=("parallel",))

    # ---- stage 1: pooling kernel over the M = N*H*W rows ----
    M = N * H * W
    tile_m = min(1024, _round_up(M, 8))
    m_pad = _round_up(M, tile_m)
    xr = x.reshape(M, C)                       # raw row-major view == torch.reshape
    if m_pad != M:
        xr = jnp.pad(xr, ((0, m_pad - M), (0, 0)))
    amat_np = np.zeros((C, cr), np.float32)    # constant averaging matrix (static bins)
    for i, (s, e) in enumerate(bins):
        amat_np[s:e, i] = 1.0 / (e - s)
    amat = jnp.asarray(amat_np)

    cat2d = pl.pallas_call(
        functools.partial(_pool_concat_kernel, bins=bins),
        out_shape=jax.ShapeDtypeStruct((m_pad, c2), jnp.float32),
        grid=(m_pad // tile_m,),
        in_specs=[pl.BlockSpec((tile_m, C), lambda i: (i, 0)),
                  pl.BlockSpec((C, cr), lambda i: (0, 0))],
        out_specs=pl.BlockSpec((tile_m, c2), lambda i: (i, 0)),
        compiler_params=cparams,
    )(xr, amat)
    cat2d = cat2d[:M]

    # ---- raw .view() back to NCHW (pure reinterpretation, like torch .view) ----
    cat_nchw = cat2d.reshape(N, c2, H, W)

    # ---- single pad pass: +1 ring, +1 extra bottom row (tap overrun), channels -> c2p ----
    w1m, b1m, w2m, b2m, c2p, crp = _prep_conv_weights(params)
    Wp = W + 2
    L2 = H * Wp                                # flattened conv-output positions per image
    a_cm = jnp.pad(cat_nchw, ((0, 0), (0, c2p - c2), (1, 2), (1, 1)))
    Lpad = (H + 3) * Wp
    a_cm = a_cm.reshape(N, c2p, Lpad)          # lane-major per-image layout

    # ---- stage 2: fused conv1+ReLU+conv2+sigmoid, grid over batch ----
    out_flat = pl.pallas_call(
        functools.partial(_fused_conv_kernel, W=W, Wp=Wp, L2=L2),
        out_shape=jax.ShapeDtypeStruct((N, 1, L2), jnp.float32),
        grid=(N,),
        in_specs=[
            pl.BlockSpec((1, c2p, Lpad), lambda n: (n, 0, 0)),
            pl.BlockSpec((crp, 9 * c2p), lambda n: (0, 0)),
            pl.BlockSpec((crp, 1), lambda n: (0, 0)),
            pl.BlockSpec((8, 9 * crp), lambda n: (0, 0)),
            pl.BlockSpec((1, 1), lambda n: (0, 0)),
        ],
        out_specs=pl.BlockSpec((1, 1, L2), lambda n: (n, 0, 0)),
        compiler_params=cparams,
    )(a_cm, w1m, b1m, w2m, b2m)

    # drop the 2 junk columns per spatial row and restore (N, 1, H, W)
    out = out_flat.reshape(N, H, Wp)[:, :, :W]
    return out.reshape(N, 1, H, W)


# ------------------------------ pure-JAX reference ------------------------------ #
def reference_forward(x, params, reduce_factor=5):
    x = x.astype(jnp.float32)
    N, C, H, W = x.shape
    cr = C // reduce_factor
    bins = _adaptive_bins(C, cr)
    one_d = x.reshape(N, H * W, C)
    mx = jnp.stack([jnp.max(one_d[..., s:e], axis=-1) for s, e in bins], axis=-1)
    av = jnp.stack([jnp.mean(one_d[..., s:e], axis=-1) for s, e in bins], axis=-1)
    cat = jnp.concatenate([mx, av], axis=-1).reshape(N, 2 * cr, H, W)

    def conv3x3(inp, w_tap, b):
        cin, cout = w_tap.shape[1], w_tap.shape[2]
        w_oihw = jnp.transpose(w_tap.reshape(3, 3, cin, cout), (3, 2, 0, 1))
        y = jax.lax.conv_general_dilated(
            inp, w_oihw, window_strides=(1, 1), padding=((1, 1), (1, 1)),
            dimension_numbers=("NCHW", "OIHW", "NCHW"))
        return y + b.reshape(1, cout, 1, 1)

    y = jnp.maximum(conv3x3(cat, params["w1"], params["b1"]), 0.0)
    return jax.nn.sigmoid(conv3x3(y, params["w2"], params["b2"]))


if __name__ == "__main__":
    key = jax.random.PRNGKey(0)
    kp, kx = jax.random.split(key)
    in_channels, reduce_factor = 20, 5               # -> Cr = 4: conv1 8->4, conv2 4->1
    N, H, W = 2, 16, 16
    params = init_params(kp, in_channels, reduce_factor)
    x = jax.random.normal(kx, (N, in_channels, H, W), dtype=jnp.float32)

    y = spatial_attention_forward(x, params, reduce_factor=reduce_factor)
    jax.block_until_ready(y)
    assert y.shape == (N, 1, H, W) and y.dtype == jnp.float32
    assert bool(jnp.all(jnp.isfinite(y)))

    y_ref = reference_forward(x, params, reduce_factor)
    err = float(jnp.max(jnp.abs(y - y_ref)))
    assert err < 5e-4, f"max abs error vs reference: {err}"
    print("KERNEL_OK")
</pallas_src>

<mosaic_0001>
module attributes {stable_mosaic.version = 11 : i64} {
  func.func @_pool_concat_kernel(%arg0: i32, %arg1: memref<512x20xf32, #tpu.memory_space<vmem>>, %arg2: memref<20x4xf32, #tpu.memory_space<vmem>>, %arg3: memref<512x8xf32, #tpu.memory_space<vmem>>) attributes {dimension_semantics = [#tpu.dimension_semantics<parallel>], iteration_bounds = array<i64: 1>, scalar_prefetch = 0 : i64, scratch_operands = 0 : i64, tpu.core_type = #tpu.core_type<tc>, window_params = [{transform_indices = @transform_0, window_bounds = array<i64: 512, 20>}, {pipeline_mode = #tpu.pipeline_mode<synchronous>, transform_indices = @transform_1, window_bounds = array<i64: 20, 4>}, {transform_indices = @transform_2, window_bounds = array<i64: 512, 8>}]} {
    %c0 = arith.constant 0 : index
    %c0_0 = arith.constant 0 : index
    %0 = vector.load %arg1[%c0, %c0_0] : memref<512x20xf32, #tpu.memory_space<vmem>>, vector<512x20xf32>
    %c0_1 = arith.constant 0 : index
    %c0_2 = arith.constant 0 : index
    %1 = vector.load %arg2[%c0_1, %c0_2] : memref<20x4xf32, #tpu.memory_space<vmem>>, vector<20x4xf32>
    %cst = arith.constant dense<0.000000e+00> : vector<512x4xf32>
    %2 = tpu.matmul %0, %1, %cst {dimension_numbers = #tpu.dot_dimension_numbers<[1], [0], [0], [1], [0, 0, 1, 1], [], []>} : vector<512x20xf32>, vector<20x4xf32>, vector<512x4xf32> -> vector<512x4xf32>
    %3 = vector.extract_strided_slice %0 {offsets = [0, 0], sizes = [512, 5], strides = [1, 1]} : vector<512x20xf32> to vector<512x5xf32>
    %cst_3 = arith.constant dense<0xFF800000> : vector<512xf32>
    %4 = vector.multi_reduction <maximumf>, %3, %cst_3 [1] : vector<512x5xf32> to vector<512xf32>
    %5 = vector.shape_cast %4 : vector<512xf32> to vector<512x1xf32>
    %6 = vector.extract_strided_slice %0 {offsets = [0, 5], sizes = [512, 5], strides = [1, 1]} : vector<512x20xf32> to vector<512x5xf32>
    %cst_4 = arith.constant dense<0xFF800000> : vector<512xf32>
    %7 = vector.multi_reduction <maximumf>, %6, %cst_4 [1] : vector<512x5xf32> to vector<512xf32>
    %8 = vector.shape_cast %7 : vector<512xf32> to vector<512x1xf32>
    %9 = vector.extract_strided_slice %0 {offsets = [0, 10], sizes = [512, 5], strides = [1, 1]} : vector<512x20xf32> to vector<512x5xf32>
    %cst_5 = arith.constant dense<0xFF800000> : vector<512xf32>
    %10 = vector.multi_reduction <maximumf>, %9, %cst_5 [1] : vector<512x5xf32> to vector<512xf32>
    %11 = vector.shape_cast %10 : vector<512xf32> to vector<512x1xf32>
    %12 = vector.extract_strided_slice %0 {offsets = [0, 15], sizes = [512, 5], strides = [1, 1]} : vector<512x20xf32> to vector<512x5xf32>
    %cst_6 = arith.constant dense<0xFF800000> : vector<512xf32>
    %13 = vector.multi_reduction <maximumf>, %12, %cst_6 [1] : vector<512x5xf32> to vector<512xf32>
    %14 = vector.shape_cast %13 : vector<512xf32> to vector<512x1xf32>
    %15 = tpu.concatenate %5, %8, %11, %14, %2 in 1 : vector<512x1xf32>, vector<512x1xf32>, vector<512x1xf32>, vector<512x1xf32>, vector<512x4xf32> -> vector<512x8xf32>
    %c0_7 = arith.constant 0 : index
    %c0_8 = arith.constant 0 : index
    %16 = vector.load %arg3[%c0_7, %c0_8] : memref<512x8xf32, #tpu.memory_space<vmem>>, vector<512x8xf32>
    tpu.vector_store %arg3[%c0_7, %c0_8], %15 {strides = array<i32>} : memref<512x8xf32, #tpu.memory_space<vmem>>, vector<512x8xf32>,
    return
  }
  func.func @transform_0(%arg0: i32) -> (i32, i32) {
    %c0_i32 = arith.constant 0 : i32
    %c0_i32_0 = arith.constant 0 : i32
    return %arg0, %c0_i32 : i32, i32
  }
  func.func @transform_1(%arg0: i32) -> (i32, i32) {
    %c0_i32 = arith.constant 0 : i32
    %c0_i32_0 = arith.constant 0 : i32
    %c0_i32_1 = arith.constant 0 : i32
    return %c0_i32, %c0_i32_0 : i32, i32
  }
  func.func @transform_2(%arg0: i32) -> (i32, i32) {
    %c0_i32 = arith.constant 0 : i32
    %c0_i32_0 = arith.constant 0 : i32
    return %arg0, %c0_i32 : i32, i32
  }
}

module attributes {stable_mosaic.version = 11 : i64} {
  func.func @_fused_conv_kernel(%arg0: i32, %arg1: memref<1x8x342xf32, #tpu.memory_space<vmem>>, %arg2: memref<8x72xf32, #tpu.memory_space<vmem>>, %arg3: memref<8x1xf32, #tpu.memory_space<vmem>>, %arg4: memref<8x72xf32, #tpu.memory_space<vmem>>, %arg5: memref<1x1xf32, #tpu.memory_space<vmem>>, %arg6: memref<1x1x288xf32, #tpu.memory_space<vmem>>) attributes {dimension_semantics = [#tpu.dimension_semantics<parallel>], iteration_bounds = array<i64: 2>, scalar_prefetch = 0 : i64, scratch_operands = 0 : i64, tpu.core_type = #tpu.core_type<tc>, window_params = [{transform_indices = @transform_0, window_bounds = array<i64: 1, 8, 342>}, {pipeline_mode = #tpu.pipeline_mode<synchronous>, transform_indices = @transform_1, window_bounds = array<i64: 8, 72>}, {pipeline_mode = #tpu.pipeline_mode<synchronous>, transform_indices = @transform_2, window_bounds = array<i64: 8, 1>}, {pipeline_mode = #tpu.pipeline_mode<synchronous>, transform_indices = @transform_3, window_bounds = array<i64: 8, 72>}, {pipeline_mode = #tpu.pipeline_mode<synchronous>, transform_indices = @transform_4, window_bounds = array<i64: 1, 1>}, {transform_indices = @transform_5, window_bounds = array<i64: 1, 1, 288>}]} {
    %c0 = arith.constant 0 : index
    %c0_0 = arith.constant 0 : index
    %c0_1 = arith.constant 0 : index
    %0 = vector.load %arg1[%c0, %c0_0, %c0_1] : memref<1x8x342xf32, #tpu.memory_space<vmem>>, vector<1x8x342xf32>
    %1 = vector.shape_cast %0 : vector<1x8x342xf32> to vector<8x342xf32>
    %2 = vector.extract_strided_slice %1 {offsets = [0, 0], sizes = [8, 288], strides = [1, 1]} : vector<8x342xf32> to vector<8x288xf32>
    %3 = vector.extract_strided_slice %1 {offsets = [0, 1], sizes = [8, 288], strides = [1, 1]} : vector<8x342xf32> to vector<8x288xf32>
    %4 = vector.extract_strided_slice %1 {offsets = [0, 2], sizes = [8, 288], strides = [1, 1]} : vector<8x342xf32> to vector<8x288xf32>
    %5 = vector.extract_strided_slice %1 {offsets = [0, 18], sizes = [8, 288], strides = [1, 1]} : vector<8x342xf32> to vector<8x288xf32>
    %6 = vector.extract_strided_slice %1 {offsets = [0, 19], sizes = [8, 288], strides = [1, 1]} : vector<8x342xf32> to vector<8x288xf32>
    %7 = vector.extract_strided_slice %1 {offsets = [0, 20], sizes = [8, 288], strides = [1, 1]} : vector<8x342xf32> to vector<8x288xf32>
    %8 = vector.extract_strided_slice %1 {offsets = [0, 36], sizes = [8, 288], strides = [1, 1]} : vector<8x342xf32> to vector<8x288xf32>
    %9 = vector.extract_strided_slice %1 {offsets = [0, 37], sizes = [8, 288], strides = [1, 1]} : vector<8x342xf32> to vector<8x288xf32>
    %10 = vector.extract_strided_slice %1 {offsets = [0, 38], sizes = [8, 288], strides = [1, 1]} : vector<8x342xf32> to vector<8x288xf32>
    %11 = tpu.concatenate %2, %3, %4, %5, %6, %7, %8, %9, %10 in 0 : vector<8x288xf32>, vector<8x288xf32>, vector<8x288xf32>, vector<8x288xf32>, vector<8x288xf32>, vector<8x288xf32>, vector<8x288xf32>, vector<8x288xf32>, vector<8x288xf32> -> vector<72x288xf32>
    %c0_2 = arith.constant 0 : index
    %c0_3 = arith.constant 0 : index
    %12 = vector.load %arg2[%c0_2, %c0_3] : memref<8x72xf32, #tpu.memory_space<vmem>>, vector<8x72xf32>
    %cst = arith.constant dense<0.000000e+00> : vector<8x288xf32>
    %13 = tpu.matmul %12, %11, %cst {dimension_numbers = #tpu.dot_dimension_numbers<[1], [0], [0], [1], [0, 0, 1, 1], [], []>} : vector<8x72xf32>, vector<72x288xf32>, vector<8x288xf32> -> vector<8x288xf32>
    %c0_4 = arith.constant 0 : index
    %c0_5 = arith.constant 0 : index
    %14 = vector.load %arg3[%c0_4, %c0_5] : memref<8x1xf32, #tpu.memory_space<vmem>>, vector<8x1xf32>
    %15 = vector.broadcast %14 : vector<8x1xf32> to vector<8x288xf32>
    %16 = arith.addf %13, %15 : vector<8x288xf32>
    %cst_6 = arith.constant 0.000000e+00 : f32
    %17 = vector.broadcast %cst_6 : f32 to vector<8x288xf32>
    %18 = arith.maximumf %16, %17 : vector<8x288xf32>
    %19 = tpu.iota {dimensions = array<i32: 1>} : vector<8x288xi32>
    %c18_i32 = arith.constant 18 : i32
    %c0_i32 = arith.constant 0 : i32
    %20 = arith.cmpi eq, %c18_i32, %c0_i32 : i32
    %c1_i32 = arith.constant 1 : i32
    %21 = arith.select %20, %c1_i32, %c18_i32 : i32
    %22 = vector.broadcast %21 : i32 to vector<8x288xi32>
    %23 = arith.remsi %19, %22 : vector<8x288xi32>
    %c0_i32_7 = arith.constant 0 : i32
    %24 = vector.broadcast %c0_i32_7 : i32 to vector<8x288xi32>
    %25 = arith.cmpi ne, %23, %24 : vector<8x288xi32>
    %c0_i32_8 = arith.constant 0 : i32
    %26 = vector.broadcast %c0_i32_8 : i32 to vector<8x288xi32>
    %27 = arith.cmpi slt, %23, %26 : vector<8x288xi32>
    %c0_i32_9 = arith.constant 0 : i32
    %28 = arith.cmpi slt, %21, %c0_i32_9 : i32
    %29 = vector.broadcast %28 : i1 to vector<8x288xi1>
    %30 = vector.broadcast %29 : vector<8x288xi1> to vector<8x288xi1>
    %31 = arith.xori %27, %30 : vector<8x288xi1>
    %32 = arith.andi %31, %25 : vector<8x288xi1>
    %33 = vector.broadcast %21 : i32 to vector<8x288xi32>
    %34 = arith.addi %23, %33 : vector<8x288xi32>
    %35 = arith.select %32, %34, %23 : vector<8x288xi1>, vector<8x288xi32>
    %c16_i32 = arith.constant 16 : i32
    %36 = vector.broadcast %c16_i32 : i32 to vector<8x288xi32>
    %37 = arith.cmpi slt, %35, %36 : vector<8x288xi32>
    %cst_10 = arith.constant 0.000000e+00 : f32
    %38 = vector.broadcast %cst_10 : f32 to vector<8x288xf32>
    %39 = arith.select %37, %18, %38 : vector<8x288xi1>, vector<8x288xf32>
    %cst_11 = arith.constant 0.000000e+00 : f32
    %40 = vector.broadcast %cst_11 : f32 to vector<8x19xf32>
    %41 = tpu.concatenate %40, %39, %40 in 1 : vector<8x19xf32>, vector<8x288xf32>, vector<8x19xf32> -> vector<8x326xf32>
    %42 = vector.extract_strided_slice %41 {offsets = [0, 0], sizes = [8, 288], strides = [1, 1]} : vector<8x326xf32> to vector<8x288xf32>
    %43 = vector.extract_strided_slice %41 {offsets = [0, 1], sizes = [8, 288], strides = [1, 1]} : vector<8x326xf32> to vector<8x288xf32>
    %44 = vector.extract_strided_slice %41 {offsets = [0, 2], sizes = [8, 288], strides = [1, 1]} : vector<8x326xf32> to vector<8x288xf32>
    %45 = vector.extract_strided_slice %41 {offsets = [0, 18], sizes = [8, 288], strides = [1, 1]} : vector<8x326xf32> to vector<8x288xf32>
    %46 = vector.extract_strided_slice %41 {offsets = [0, 19], sizes = [8, 288], strides = [1, 1]} : vector<8x326xf32> to vector<8x288xf32>
    %47 = vector.extract_strided_slice %41 {offsets = [0, 20], sizes = [8, 288], strides = [1, 1]} : vector<8x326xf32> to vector<8x288xf32>
    %48 = vector.extract_strided_slice %41 {offsets = [0, 36], sizes = [8, 288], strides = [1, 1]} : vector<8x326xf32> to vector<8x288xf32>
    %49 = vector.extract_strided_slice %41 {offsets = [0, 37], sizes = [8, 288], strides = [1, 1]} : vector<8x326xf32> to vector<8x288xf32>
    %50 = vector.extract_strided_slice %41 {offsets = [0, 38], sizes = [8, 288], strides = [1, 1]} : vector<8x326xf32> to vector<8x288xf32>
    %51 = tpu.concatenate %42, %43, %44, %45, %46, %47, %48, %49, %50 in 0 : vector<8x288xf32>, vector<8x288xf32>, vector<8x288xf32>, vector<8x288xf32>, vector<8x288xf32>, vector<8x288xf32>, vector<8x288xf32>, vector<8x288xf32>, vector<8x288xf32> -> vector<72x288xf32>
    %c0_12 = arith.constant 0 : index
    %c0_13 = arith.constant 0 : index
    %52 = vector.load %arg4[%c0_12, %c0_13] : memref<8x72xf32, #tpu.memory_space<vmem>>, vector<8x72xf32>
    %cst_14 = arith.constant dense<0.000000e+00> : vector<8x288xf32>
    %53 = tpu.matmul %52, %51, %cst_14 {dimension_numbers = #tpu.dot_dimension_numbers<[1], [0], [0], [1], [0, 0, 1, 1], [], []>} : vector<8x72xf32>, vector<72x288xf32>, vector<8x288xf32> -> vector<8x288xf32>
    %54 = vector.extract_strided_slice %53 {offsets = [0, 0], sizes = [1, 288], strides = [1, 1]} : vector<8x288xf32> to vector<1x288xf32>
    %c0_15 = arith.constant 0 : index
    %c0_16 = arith.constant 0 : index
    %55 = vector.load %arg5[%c0_15, %c0_16] : memref<1x1xf32, #tpu.memory_space<vmem>>, vector<1x1xf32>
    %56 = vector.broadcast %55 : vector<1x1xf32> to vector<1x288xf32>
    %57 = arith.addf %54, %56 : vector<1x288xf32>
    %58 = arith.negf %57 : vector<1x288xf32>
    %59 = math.exp %58 : vector<1x288xf32>
    %cst_17 = arith.constant 1.000000e+00 : f32
    %60 = vector.broadcast %cst_17 : f32 to vector<1x288xf32>
    %61 = arith.addf %60, %59 : vector<1x288xf32>
    %62 = arith.divf %60, %61 : vector<1x288xf32>
    %c0_18 = arith.constant 0 : index
    %c0_19 = arith.constant 0 : index
    %c0_20 = arith.constant 0 : index
    %63 = vector.load %arg6[%c0_18, %c0_19, %c0_20] : memref<1x1x288xf32, #tpu.memory_space<vmem>>, vector<1x1x288xf32>
    %64 = vector.shape_cast %63 : vector<1x1x288xf32> to vector<1x288xf32>
    %65 = vector.shape_cast %62 : vector<1x288xf32> to vector<1x1x288xf32>
    tpu.vector_store %arg6[%c0_18, %c0_19, %c0_20], %65 {strides = array<i32>} : memref<1x1x288xf32, #tpu.memory_space<vmem>>, vector<1x1x288xf32>,
    return
  }
  func.func @transform_0(%arg0: i32) -> (i32, i32, i32) {
    %c0_i32 = arith.constant 0 : i32
    %c0_i32_0 = arith.constant 0 : i32
    %c0_i32_1 = arith.constant 0 : i32
    return %arg0, %c0_i32, %c0_i32_0 : i32, i32, i32
  }
  func.func @transform_1(%arg0: i32) -> (i32, i32) {
    %c0_i32 = arith.constant 0 : i32
    %c0_i32_0 = arith.constant 0 : i32
    %c0_i32_1 = arith.constant 0 : i32
    return %c0_i32, %c0_i32_0 : i32, i32
  }
  func.func @transform_2(%arg0: i32) -> (i32, i32) {
    %c0_i32 = arith.constant 0 : i32
    %c0_i32_0 = arith.constant 0 : i32
    %c0_i32_1 = arith.constant 0 : i32
    return %c0_i32, %c0_i32_0 : i32, i32
  }
  func.func @transform_3(%arg0: i32) -> (i32, i32) {
    %c0_i32 = arith.constant 0 : i32
    %c0_i32_0 = arith.constant 0 : i32
    %c0_i32_1 = arith.constant 0 : i32
    return %c0_i32, %c0_i32_0 : i32, i32
  }
  func.func @transform_4(%arg0: i32) -> (i32, i32) {
    %c0_i32 = arith.constant 0 : i32
    %c0_i32_0 = arith.constant 0 : i32
    %c0_i32_1 = arith.constant 0 : i32
    return %c0_i32, %c0_i32_0 : i32, i32
  }
  func.func @transform_5(%arg0: i32) -> (i32, i32, i32) {
    %c0_i32 = arith.constant 0 : i32
    %c0_i32_0 = arith.constant 0 : i32
    %c0_i32_1 = arith.constant 0 : i32
    return %arg0, %c0_i32, %c0_i32_0 : i32, i32, i32
  }
}

</mosaic_0001>

<llo_original>
// kernel: spatial_attention_forward.2
$region0: #{spatial_attention_forward.2}
  #allocation0 [shape = 'u32[]', space=smem, size = 0x4, offset = 0x4, fixed_abs, tag = 'smem constant byte address 0x4 - core index']
  #allocation1 [shape = 'u32[144,128]{1,0:T(1,128)}', space=vmem, size = 0x12000, scoped, tag = 'internal scratch']
  %s0 = inlined_call_operand.vmem [shape: f32[512,20], index: 0, kind: input, shape index: {}]
  %s1 = inlined_call_operand.vmem [shape: f32[20,4], index: 1, kind: input, shape index: {}]
  %s2 = inlined_call_operand.vmem [shape: f32[512,8], index: 2, kind: output, shape index: {}]
  %s3 = sld [smem:[#allocation0]]
  $region18: #{spatial_attention_forward.2} parent=0
    _
  %s5 = ssub.s32 1, %s3
  %s6 = scalar_select 0, %s5, %s3
  // Predicated region
  $region2: #{spatial_attention_forward.2} parent=0 // pred_check
    _
  $region3: #{spatial_attention_forward.2} parent=0 // pred_check_branch
    %8 = sbr.rel (0) target = $region5
  $region4: #{spatial_attention_forward.2} parent=0 // pred_region
    _
  $region5: #{spatial_attention_forward.2} parent=0 // pred_fallthru
    _
  // Predicated region
  $region6: #{spatial_attention_forward.2} parent=0 // pred_check
    _
  $region7: #{spatial_attention_forward.2} parent=0 // pred_check_branch
    %10 = sbr.rel (0) target = $region9
  $region8: #{spatial_attention_forward.2} parent=0 // pred_region
    _
  $region9: #{spatial_attention_forward.2} parent=0 // pred_fallthru
    _
  %v11 = vld [vmem:[%s0] sm:$0xff]
  %v12 = vld [vmem:[%s0 + $0x8] sm:$0xff]
  %v13 = vld [vmem:[%s0 + $0x10] sm:$0xff]
  %v14 = vld [vmem:[%s0 + $0x18] sm:$0xff]
  %v15 = vld [vmem:[%s0 + $0x20] sm:$0xff]
  %v16 = vld [vmem:[%s0 + $0x28] sm:$0xff]
  %v17 = vld [vmem:[%s0 + $0x30] sm:$0xff]
  %v18 = vld [vmem:[%s0 + $0x38] sm:$0xff]
  %v19 = vld [vmem:[%s0 + $0x40] sm:$0xff]
  %v20 = vld [vmem:[%s0 + $0x48] sm:$0xff]
  %v21 = vld [vmem:[%s0 + $0x50] sm:$0xff]
  %v22 = vld [vmem:[%s0 + $0x58] sm:$0xff]
  %v23 = vld [vmem:[%s0 + $0x60] sm:$0xff]
  %v24 = vld [vmem:[%s0 + $0x68] sm:$0xff]
  %v25 = vld [vmem:[%s0 + $0x70] sm:$0xff]
  %v26 = vld [vmem:[%s0 + $0x78] sm:$0xff]
  %v27 = vld [vmem:[%s0 + $0x80] sm:$0xff]
  %v28 = vld [vmem:[%s0 + $0x88] sm:$0xff]
  %v29 = vld [vmem:[%s0 + $0x90] sm:$0xff]
  %v30 = vld [vmem:[%s0 + $0x98] sm:$0xff]
  %v31 = vld [vmem:[%s0 + $0xa0] sm:$0xff]
  %v32 = vld [vmem:[%s0 + $0xa8] sm:$0xff]
  %v33 = vld [vmem:[%s0 + $0xb0] sm:$0xff]
  %v34 = vld [vmem:[%s0 + $0xb8] sm:$0xff]
  %v35 = vld [vmem:[%s0 + $0xc0] sm:$0xff]
  %v36 = vld [vmem:[%s0 + $0xc8] sm:$0xff]
  %v37 = vld [vmem:[%s0 + $0xd0] sm:$0xff]
  %v38 = vld [vmem:[%s0 + $0xd8] sm:$0xff]
  %v39 = vld [vmem:[%s0 + $0xe0] sm:$0xff]
  %v40 = vld [vmem:[%s0 + $0xe8] sm:$0xff]
  %v41 = vld [vmem:[%s0 + $0xf0] sm:$0xff]
  %v42 = vld [vmem:[%s0 + $0xf8] sm:$0xff]
  %v43 = vld [vmem:[%s0 + $0x100] sm:$0xff]
  %v44 = vld [vmem:[%s0 + $0x108] sm:$0xff]
  %v45 = vld [vmem:[%s0 + $0x110] sm:$0xff]
  %v46 = vld [vmem:[%s0 + $0x118] sm:$0xff]
  %v47 = vld [vmem:[%s0 + $0x120] sm:$0xff]
  %v48 = vld [vmem:[%s0 + $0x128] sm:$0xff]
  %v49 = vld [vmem:[%s0 + $0x130] sm:$0xff]
  %v50 = vld [vmem:[%s0 + $0x138] sm:$0xff]
  %v51 = vld [vmem:[%s0 + $0x140] sm:$0xff]
  %v52 = vld [vmem:[%s0 + $0x148] sm:$0xff]
  %v53 = vld [vmem:[%s0 + $0x150] sm:$0xff]
  %v54 = vld [vmem:[%s0 + $0x158] sm:$0xff]
  %v55 = vld [vmem:[%s0 + $0x160] sm:$0xff]
  %v56 = vld [vmem:[%s0 + $0x168] sm:$0xff]
  %v57 = vld [vmem:[%s0 + $0x170] sm:$0xff]
  %v58 = vld [vmem:[%s0 + $0x178] sm:$0xff]
  %v59 = vld [vmem:[%s0 + $0x180] sm:$0xff]
  %v60 = vld [vmem:[%s0 + $0x188] sm:$0xff]
  %v61 = vld [vmem:[%s0 + $0x190] sm:$0xff]
  %v62 = vld [vmem:[%s0 + $0x198] sm:$0xff]
  %v63 = vld [vmem:[%s0 + $0x1a0] sm:$0xff]
  %v64 = vld [vmem:[%s0 + $0x1a8] sm:$0xff]
  %v65 = vld [vmem:[%s0 + $0x1b0] sm:$0xff]
  %v66 = vld [vmem:[%s0 + $0x1b8] sm:$0xff]
  %v67 = vld [vmem:[%s0 + $0x1c0] sm:$0xff]
  %v68 = vld [vmem:[%s0 + $0x1c8] sm:$0xff]
  %v69 = vld [vmem:[%s0 + $0x1d0] sm:$0xff]
  %v70 = vld [vmem:[%s0 + $0x1d8] sm:$0xff]
  %v71 = vld [vmem:[%s0 + $0x1e0] sm:$0xff]
  %v72 = vld [vmem:[%s0 + $0x1e8] sm:$0xff]
  %v73 = vld [vmem:[%s0 + $0x1f0] sm:$0xff]
  %v74 = vld [vmem:[%s0 + $0x1f8] sm:$0xff]
  %v75 = vld [vmem:[%s1] sm:$0xff]
  %v76 = vld [vmem:[%s1 + $0x8] sm:$0xff]
  %v77 = vld [vmem:[%s1 + $0x10] sm:$0xf]
  %vm78 = vcmask 162816
  %v80 = vsel %vm78, %v11, 0
  %v83 = vsel %vm78, %v12, 0
  %v86 = vsel %vm78, %v13, 0
  %v89 = vsel %vm78, %v14, 0
  %v92 = vsel %vm78, %v15, 0
  %v95 = vsel %vm78, %v16, 0
  %v98 = vsel %vm78, %v17, 0
  %v101 = vsel %vm78, %v18, 0
  %v104 = vsel %vm78, %v19, 0
  %v107 = vsel %vm78, %v20, 0
  %v110 = vsel %vm78, %v21, 0
  %v113 = vsel %vm78, %v22, 0
  %v116 = vsel %vm78, %v23, 0
  %v119 = vsel %vm78, %v24, 0
  %v122 = vsel %vm78, %v25, 0
  %v125 = vsel %vm78, %v26, 0
  %v128 = vsel %vm78, %v27, 0
  %v131 = vsel %vm78, %v28, 0
  %v134 = vsel %vm78, %v29, 0
  %v137 = vsel %vm78, %v30, 0
  %v140 = vsel %vm78, %v31, 0
  %v143 = vsel %vm78, %v32, 0
  %v146 = vsel %vm78, %v33, 0
  %v149 = vsel %vm78, %v34, 0
  %v152 = vsel %vm78, %v35, 0
  %v155 = vsel %vm78, %v36, 0
  %v158 = vsel %vm78, %v37, 0
  %v161 = vsel %vm78, %v38, 0
  %v164 = vsel %vm78, %v39, 0
  %v167 = vsel %vm78, %v40, 0
  %v170 = vsel %vm78, %v41, 0
  %v173 = vsel %vm78, %v42, 0
  %v176 = vsel %vm78, %v43, 0
  %v179 = vsel %vm78, %v44, 0
  %v182 = vsel %vm78, %v45, 0
  %v185 = vsel %vm78, %v46, 0
  %v188 = vsel %vm78, %v47, 0
  %v191 = vsel %vm78, %v48, 0
  %v194 = vsel %vm78, %v49, 0
  %v197 = vsel %vm78, %v50, 0
  %v200 = vsel %vm78, %v51, 0
  %v203 = vsel %vm78, %v52, 0
  %v206 = vsel %vm78, %v53, 0
  %v209 = vsel %vm78, %v54, 0
  %v212 = vsel %vm78, %v55, 0
  %v215 = vsel %vm78, %v56, 0
  %v218 = vsel %vm78, %v57, 0
  %v221 = vsel %vm78, %v58, 0
  %v224 = vsel %vm78, %v59, 0
  %v227 = vsel %vm78, %v60, 0
  %v230 = vsel %vm78, %v61, 0
  %v233 = vsel %vm78, %v62, 0
  %v236 = vsel %vm78, %v63, 0
  %v239 = vsel %vm78, %v64, 0
  %v242 = vsel %vm78, %v65, 0
  %v245 = vsel %vm78, %v66, 0
  %v248 = vsel %vm78, %v67, 0
  %v251 = vsel %vm78, %v68, 0
  %v254 = vsel %vm78, %v69, 0
  %v257 = vsel %vm78, %v70, 0
  %v260 = vsel %vm78, %v71, 0
  %v263 = vsel %vm78, %v72, 0
  %v266 = vsel %vm78, %v73, 0
  %v269 = vsel %vm78, %v74, 0
  %vm271 = vcmask 1043456
  %v273 = vsel %vm271, %v77, 0
  %275 = vmatprep.subr.mxu0 0.0
  %276 = vmatpush1.msra.mxu0 0.0
  %277 = vmatprep.subr.mxu0 0.0
  %278 = vmatpush1.msra.mxu0 0.0
  %279 = vmatprep.subr.mxu0 0.0
  %280 = vmatpush1.msra.mxu0 0.0
  %281 = vmatprep.subr.mxu0 0.0
  %282 = vmatpush1.msra.mxu0 0.0
  %283 = vmatprep.subr.mxu0 0.0
  %284 = vmatpush1.msra.mxu0 0.0
  %285 = vmatprep.subr.mxu0 0.0
  %286 = vmatpush1.msra.mxu0 0.0
  %287 = vmatprep.subr.mxu0 0.0
  %288 = vmatpush1.msra.mxu0 0.0
  %289 = vmatprep.subr.mxu0 0.0
  %290 = vmatpush1.msra.mxu0 0.0
  %291 = vmatprep.subr.mxu0 0.0
  %292 = vmatpush1.msra.mxu0 0.0
  %293 = vmatprep.subr.mxu0 0.0
  %294 = vmatpush1.msra.mxu0 0.0
  %295 = vmatprep.subr.mxu0 0.0
  %296 = vmatpush1.msra.mxu0 0.0
  %297 = vmatprep.subr.mxu0 0.0
  %298 = vmatpush1.msra.mxu0 0.0
  %299 = vmatprep.subr.mxu0 0.0
  %300 = vmatpush1.msra.mxu0 0.0
  %301 = vmatprep.subr.mxu0 0.0
  %302 = vmatpush1.msra.mxu0 %v273
  %303 = vmatprep.subr.mxu0 0.0
  %304 = vmatpush1.msra.mxu0 %v76
  %305 = vmatprep.subr.mxu0 0.0
  %306 = vmatpush1.msra.mxu0 %v75
  %307 = vmatprep.subr.mxu0 0.0
  %308 = vmatpush2.msra.mxu0 0.0
  %309 = vmatprep.subr.mxu0 0.0
  %310 = vmatpush2.msra.mxu0 0.0
  %311 = vmatprep.subr.mxu0 0.0
  %312 = vmatpush2.msra.mxu0 0.0
  %313 = vmatprep.subr.mxu0 0.0
  %314 = vmatpush2.msra.mxu0 0.0
  %315 = vmatprep.subr.mxu0 0.0
  %316 = vmatpush2.msra.mxu0 0.0
  %317 = vmatprep.subr.mxu0 0.0
  %318 = vmatpush2.msra.mxu0 0.0
  %319 = vmatprep.subr.mxu0 0.0
  %320 = vmatpush2.msra.mxu0 0.0
  %321 = vmatprep.subr.mxu0 0.0
  %322 = vmatpush2.msra.mxu0 0.0
  %323 = vmatprep.subr.mxu0 0.0
  %324 = vmatpush2.msra.mxu0 0.0
  %325 = vmatprep.subr.mxu0 0.0
  %326 = vmatpush2.msra.mxu0 0.0
  %327 = vmatprep.subr.mxu0 0.0
  %328 = vmatpush2.msra.mxu0 0.0
  %329 = vmatprep.subr.mxu0 0.0
  %330 = vmatpush2.msra.mxu0 0.0
  %331 = vmatprep.subr.mxu0 0.0
  %332 = vmatpush2.msra.mxu0 0.0
  %333 = vmatprep.subr.mxu0 0.0
  %334 = vmatpush2.msra.mxu0 0.0
  %335 = vmatprep.subr.mxu0 0.0
  %336 = vmatpush2.msra.mxu0 0.0
  %337 = vmatprep.subr.mxu0 0.0
  %338 = vmatpush2.msra.mxu0 0.0
  %339 = vmatprep.mubr.f32.mxu0 0.0
  %340 = vmatmul.mubr.f32.gmra.mxu0 %v80
  %v341 = vpop.f32.mrf.mxu0
  %v342 = vadd.f32 0.0, %v341
  %v343 = vpop.f32.mrf.mxu0
  %344 = vmatprep.mubr.f32.mxu0 0.0
  %345 = vmatmul.mubr.f32.gmra.mxu0 %v83
  %v346 = vpop.f32.mrf.mxu0
  %v347 = vadd.f32 0.0, %v346
  %v348 = vpop.f32.mrf.mxu0
  %349 = vmatprep.mubr.f32.mxu0 0.0
  %350 = vmatmul.mubr.f32.gmra.mxu0 %v86
  %v351 = vpop.f32.mrf.mxu0
  %v352 = vadd.f32 0.0, %v351
  %v353 = vpop.f32.mrf.mxu0
  %354 = vmatprep.mubr.f32.mxu0 0.0
  %355 = vmatmul.mubr.f32.gmra.mxu0 %v89
  %v356 = vpop.f32.mrf.mxu0
  %v357 = vadd.f32 0.0, %v356
  %v358 = vpop.f32.mrf.mxu0
  %359 = vmatprep.mubr.f32.mxu0 0.0
  %360 = vmatmul.mubr.f32.gmra.mxu0 %v92
  %v361 = vpop.f32.mrf.mxu0
  %v362 = vadd.f32 0.0, %v361
  %v363 = vpop.f32.mrf.mxu0
  %364 = vmatprep.mubr.f32.mxu0 0.0
  %365 = vmatmul.mubr.f32.gmra.mxu0 %v95
  %v366 = vpop.f32.mrf.mxu0
  %v367 = vadd.f32 0.0, %v366
  %v368 = vpop.f32.mrf.mxu0
  %369 = vmatprep.mubr.f32.mxu0 0.0
  %370 = vmatmul.mubr.f32.gmra.mxu0 %v98
  %v371 = vpop.f32.mrf.mxu0
  %v372 = vadd.f32 0.0, %v371
  %v373 = vpop.f32.mrf.mxu0
  %374 = vmatprep.mubr.f32.mxu0 0.0
  %375 = vmatmul.mubr.f32.gmra.mxu0 %v101
  %v376 = vpop.f32.mrf.mxu0
  %v377 = vadd.f32 0.0, %v376
  %v378 = vpop.f32.mrf.mxu0
  %379 = vmatprep.mubr.f32.mxu0 0.0
  %380 = vmatmul.mubr.f32.gmra.mxu0 %v104
  %v381 = vpop.f32.mrf.mxu0
  %v382 = vadd.f32 0.0, %v381
  %v383 = vpop.f32.mrf.mxu0
  %384 = vmatprep.mubr.f32.mxu0 0.0
  %385 = vmatmul.mubr.f32.gmra.mxu0 %v107
  %v386 = vpop.f32.mrf.mxu0
  %v387 = vadd.f32 0.0, %v386
  %v388 = vpop.f32.mrf.mxu0
  %389 = vmatprep.mubr.f32.mxu0 0.0
  %390 = vmatmul.mubr.f32.gmra.mxu0 %v110
  %v391 = vpop.f32.mrf.mxu0
  %v392 = vadd.f32 0.0, %v391
  %v393 = vpop.f32.mrf.mxu0
  %394 = vmatprep.mubr.f32.mxu0 0.0
  %395 = vmatmul.mubr.f32.gmra.mxu0 %v113
  %v396 = vpop.f32.mrf.mxu0
  %v397 = vadd.f32 0.0, %v396
  %v398 = vpop.f32.mrf.mxu0
  %399 = vmatprep.mubr.f32.mxu0 0.0
  %400 = vmatmul.mubr.f32.gmra.mxu0 %v116
  %v401 = vpop.f32.mrf.mxu0
  %v402 = vadd.f32 0.0, %v401
  %v403 = vpop.f32.mrf.mxu0
  %404 = vmatprep.mubr.f32.mxu0 0.0
  %405 = vmatmul.mubr.f32.gmra.mxu0 %v119
  %v406 = vpop.f32.mrf.mxu0
  %v407 = vadd.f32 0.0, %v406
  %v408 = vpop.f32.mrf.mxu0
  %409 = vmatprep.mubr.f32.mxu0 0.0
  %410 = vmatmul.mubr.f32.gmra.mxu0 %v122
  %v411 = vpop.f32.mrf.mxu0
  %v412 = vadd.f32 0.0, %v411
  %v413 = vpop.f32.mrf.mxu0
  %414 = vmatprep.mubr.f32.mxu0 0.0
  %415 = vmatmul.mubr.f32.gmra.mxu0 %v125
  %v416 = vpop.f32.mrf.mxu0
  %v417 = vadd.f32 0.0, %v416
  %v418 = vpop.f32.mrf.mxu0
  %419 = vmatprep.mubr.f32.mxu0 0.0
  %420 = vmatmul.mubr.f32.gmra.mxu0 %v128
  %v421 = vpop.f32.mrf.mxu0
  %v422 = vadd.f32 0.0, %v421
  %v423 = vpop.f32.mrf.mxu0
  %424 = vmatprep.mubr.f32.mxu0 0.0
  %425 = vmatmul.mubr.f32.gmra.mxu0 %v131
  %v426 = vpop.f32.mrf.mxu0
  %v427 = vadd.f32 0.0, %v426
  %v428 = vpop.f32.mrf.mxu0
  %429 = vmatprep.mubr.f32.mxu0 0.0
  %430 = vmatmul.mubr.f32.gmra.mxu0 %v134
  %v431 = vpop.f32.mrf.mxu0
  %v432 = vadd.f32 0.0, %v431
  %v433 = vpop.f32.mrf.mxu0
  %434 = vmatprep.mubr.f32.mxu0 0.0
  %435 = vmatmul.mubr.f32.gmra.mxu0 %v137
  %v436 = vpop.f32.mrf.mxu0
  %v437 = vadd.f32 0.0, %v436
  %v438 = vpop.f32.mrf.mxu0
  %439 = vmatprep.mubr.f32.mxu0 0.0
  %440 = vmatmul.mubr.f32.gmra.mxu0 %v140
  %v441 = vpop.f32.mrf.mxu0
  %v442 = vadd.f32 0.0, %v441
  %v443 = vpop.f32.mrf.mxu0
  %444 = vmatprep.mubr.f32.mxu0 0.0
  %445 = vmatmul.mubr.f32.gmra.mxu0 %v143
  %v446 = vpop.f32.mrf.mxu0
  %v447 = vadd.f32 0.0, %v446
  %v448 = vpop.f32.mrf.mxu0
  %449 = vmatprep.mubr.f32.mxu0 0.0
  %450 = vmatmul.mubr.f32.gmra.mxu0 %v146
  %v451 = vpop.f32.mrf.mxu0
  %v452 = vadd.f32 0.0, %v451
  %v453 = vpop.f32.mrf.mxu0
  %454 = vmatprep.mubr.f32.mxu0 0.0
  %455 = vmatmul.mubr.f32.gmra.mxu0 %v149
  %v456 = vpop.f32.mrf.mxu0
  %v457 = vadd.f32 0.0, %v456
  %v458 = vpop.f32.mrf.mxu0
  %459 = vmatprep.mubr.f32.mxu0 0.0
  %460 = vmatmul.mubr.f32.gmra.mxu0 %v152
  %v461 = vpop.f32.mrf.mxu0
  %v462 = vadd.f32 0.0, %v461
  %v463 = vpop.f32.mrf.mxu0
  %464 = vmatprep.mubr.f32.mxu0 0.0
  %465 = vmatmul.mubr.f32.gmra.mxu0 %v155
  %v466 = vpop.f32.mrf.mxu0
  %v467 = vadd.f32 0.0, %v466
  %v468 = vpop.f32.mrf.mxu0
  %469 = vmatprep.mubr.f32.mxu0 0.0
  %470 = vmatmul.mubr.f32.gmra.mxu0 %v158
  %v471 = vpop.f32.mrf.mxu0
  %v472 = vadd.f32 0.0, %v471
  %v473 = vpop.f32.mrf.mxu0
  %474 = vmatprep.mubr.f32.mxu0 0.0
  %475 = vmatmul.mubr.f32.gmra.mxu0 %v161
  %v476 = vpop.f32.mrf.mxu0
  %v477 = vadd.f32 0.0, %v476
  %v478 = vpop.f32.mrf.mxu0
  %479 = vmatprep.mubr.f32.mxu0 0.0
  %480 = vmatmul.mubr.f32.gmra.mxu0 %v164
  %v481 = vpop.f32.mrf.mxu0
  %v482 = vadd.f32 0.0, %v481
  %v483 = vpop.f32.mrf.mxu0
  %484 = vmatprep.mubr.f32.mxu0 0.0
  %485 = vmatmul.mubr.f32.gmra.mxu0 %v167
  %v486 = vpop.f32.mrf.mxu0
  %v487 = vadd.f32 0.0, %v486
  %v488 = vpop.f32.mrf.mxu0
  %489 = vmatprep.mubr.f32.mxu0 0.0
  %490 = vmatmul.mubr.f32.gmra.mxu0 %v170
  %v491 = vpop.f32.mrf.mxu0
  %v492 = vadd.f32 0.0, %v491
  %v493 = vpop.f32.mrf.mxu0
  %494 = vmatprep.mubr.f32.mxu0 0.0
  %495 = vmatmul.mubr.f32.gmra.mxu0 %v173
  %v496 = vpop.f32.mrf.mxu0
  %v497 = vadd.f32 0.0, %v496
  %v498 = vpop.f32.mrf.mxu0
  %499 = vmatprep.mubr.f32.mxu0 0.0
  %500 = vmatmul.mubr.f32.gmra.mxu0 %v176
  %v501 = vpop.f32.mrf.mxu0
  %v502 = vadd.f32 0.0, %v501
  %v503 = vpop.f32.mrf.mxu0
  %504 = vmatprep.mubr.f32.mxu0 0.0
  %505 = vmatmul.mubr.f32.gmra.mxu0 %v179
  %v506 = vpop.f32.mrf.mxu0
  %v507 = vadd.f32 0.0, %v506
  %v508 = vpop.f32.mrf.mxu0
  %509 = vmatprep.mubr.f32.mxu0 0.0
  %510 = vmatmul.mubr.f32.gmra.mxu0 %v182
  %v511 = vpop.f32.mrf.mxu0
  %v512 = vadd.f32 0.0, %v511
  %v513 = vpop.f32.mrf.mxu0
  %514 = vmatprep.mubr.f32.mxu0 0.0
  %515 = vmatmul.mubr.f32.gmra.mxu0 %v185
  %v516 = vpop.f32.mrf.mxu0
  %v517 = vadd.f32 0.0, %v516
  %v518 = vpop.f32.mrf.mxu0
  %519 = vmatprep.mubr.f32.mxu0 0.0
  %520 = vmatmul.mubr.f32.gmra.mxu0 %v188
  %v521 = vpop.f32.mrf.mxu0
  %v522 = vadd.f32 0.0, %v521
  %v523 = vpop.f32.mrf.mxu0
  %524 = vmatprep.mubr.f32.mxu0 0.0
  %525 = vmatmul.mubr.f32.gmra.mxu0 %v191
  %v526 = vpop.f32.mrf.mxu0
  %v527 = vadd.f32 0.0, %v526
  %v528 = vpop.f32.mrf.mxu0
  %529 = vmatprep.mubr.f32.mxu0 0.0
  %530 = vmatmul.mubr.f32.gmra.mxu0 %v194
  %v531 = vpop.f32.mrf.mxu0
  %v532 = vadd.f32 0.0, %v531
  %v533 = vpop.f32.mrf.mxu0
  %534 = vmatprep.mubr.f32.mxu0 0.0
  %535 = vmatmul.mubr.f32.gmra.mxu0 %v197
  %v536 = vpop.f32.mrf.mxu0
  %v537 = vadd.f32 0.0, %v536
  %v538 = vpop.f32.mrf.mxu0
  %539 = vmatprep.mubr.f32.mxu0 0.0
  %540 = vmatmul.mubr.f32.gmra.mxu0 %v200
  %v541 = vpop.f32.mrf.mxu0
  %v542 = vadd.f32 0.0, %v541
  %v543 = vpop.f32.mrf.mxu0
  %544 = vmatprep.mubr.f32.mxu0 0.0
  %545 = vmatmul.mubr.f32.gmra.mxu0 %v203
  %v546 = vpop.f32.mrf.mxu0
  %v547 = vadd.f32 0.0, %v546
  %v548 = vpop.f32.mrf.mxu0
  %549 = vmatprep.mubr.f32.mxu0 0.0
  %550 = vmatmul.mubr.f32.gmra.mxu0 %v206
  %v551 = vpop.f32.mrf.mxu0
  %v552 = vadd.f32 0.0, %v551
  %v553 = vpop.f32.mrf.mxu0
  %554 = vmatprep.mubr.f32.mxu0 0.0
  %555 = vmatmul.mubr.f32.gmra.mxu0 %v209
  %v556 = vpop.f32.mrf.mxu0
  %v557 = vadd.f32 0.0, %v556
  %v558 = vpop.f32.mrf.mxu0
  %559 = vmatprep.mubr.f32.mxu0 0.0
  %560 = vmatmul.mubr.f32.gmra.mxu0 %v212
  %v561 = vpop.f32.mrf.mxu0
  %v562 = vadd.f32 0.0, %v561
  %v563 = vpop.f32.mrf.mxu0
  %564 = vmatprep.mubr.f32.mxu0 0.0
  %565 = vmatmul.mubr.f32.gmra.mxu0 %v215
  %v566 = vpop.f32.mrf.mxu0
  %v567 = vadd.f32 0.0, %v566
  %v568 = vpop.f32.mrf.mxu0
  %569 = vmatprep.mubr.f32.mxu0 0.0
  %570 = vmatmul.mubr.f32.gmra.mxu0 %v218
  %v571 = vpop.f32.mrf.mxu0
  %v572 = vadd.f32 0.0, %v571
  %v573 = vpop.f32.mrf.mxu0
  %574 = vmatprep.mubr.f32.mxu0 0.0
  %575 = vmatmul.mubr.f32.gmra.mxu0 %v221
  %v576 = vpop.f32.mrf.mxu0
  %v577 = vadd.f32 0.0, %v576
  %v578 = vpop.f32.mrf.mxu0
  %579 = vmatprep.mubr.f32.mxu0 0.0
  %580 = vmatmul.mubr.f32.gmra.mxu0 %v224
  %v581 = vpop.f32.mrf.mxu0
  %v582 = vadd.f32 0.0, %v581
  %v583 = vpop.f32.mrf.mxu0
  %584 = vmatprep.mubr.f32.mxu0 0.0
  %585 = vmatmul.mubr.f32.gmra.mxu0 %v227
  %v586 = vpop.f32.mrf.mxu0
  %v587 = vadd.f32 0.0, %v586
  %v588 = vpop.f32.mrf.mxu0
  %589 = vmatprep.mubr.f32.mxu0 0.0
  %590 = vmatmul.mubr.f32.gmra.mxu0 %v230
  %v591 = vpop.f32.mrf.mxu0
  %v592 = vadd.f32 0.0, %v591
  %v593 = vpop.f32.mrf.mxu0
  %594 = vmatprep.mubr.f32.mxu0 0.0
  %595 = vmatmul.mubr.f32.gmra.mxu0 %v233
  %v596 = vpop.f32.mrf.mxu0
  %v597 = vadd.f32 0.0, %v596
  %v598 = vpop.f32.mrf.mxu0
  %599 = vmatprep.mubr.f32.mxu0 0.0
  %600 = vmatmul.mubr.f32.gmra.mxu0 %v236
  %v601 = vpop.f32.mrf.mxu0
  %v602 = vadd.f32 0.0, %v601
  %v603 = vpop.f32.mrf.mxu0
  %604 = vmatprep.mubr.f32.mxu0 0.0
  %605 = vmatmul.mubr.f32.gmra.mxu0 %v239
  %v606 = vpop.f32.mrf.mxu0
  %v607 = vadd.f32 0.0, %v606
  %v608 = vpop.f32.mrf.mxu0
  %609 = vmatprep.mubr.f32.mxu0 0.0
  %610 = vmatmul.mubr.f32.gmra.mxu0 %v242
  %v611 = vpop.f32.mrf.mxu0
  %v612 = vadd.f32 0.0, %v611
  %v613 = vpop.f32.mrf.mxu0
  %614 = vmatprep.mubr.f32.mxu0 0.0
  %615 = vmatmul.mubr.f32.gmra.mxu0 %v245
  %v616 = vpop.f32.mrf.mxu0
  %v617 = vadd.f32 0.0, %v616
  %v618 = vpop.f32.mrf.mxu0
  %619 = vmatprep.mubr.f32.mxu0 0.0
  %620 = vmatmul.mubr.f32.gmra.mxu0 %v248
  %v621 = vpop.f32.mrf.mxu0
  %v622 = vadd.f32 0.0, %v621
  %v623 = vpop.f32.mrf.mxu0
  %624 = vmatprep.mubr.f32.mxu0 0.0
  %625 = vmatmul.mubr.f32.gmra.mxu0 %v251
  %v626 = vpop.f32.mrf.mxu0
  %v627 = vadd.f32 0.0, %v626
  %v628 = vpop.f32.mrf.mxu0
  %629 = vmatprep.mubr.f32.mxu0 0.0
  %630 = vmatmul.mubr.f32.gmra.mxu0 %v254
  %v631 = vpop.f32.mrf.mxu0
  %v632 = vadd.f32 0.0, %v631
  %v633 = vpop.f32.mrf.mxu0
  %634 = vmatprep.mubr.f32.mxu0 0.0
  %635 = vmatmul.mubr.f32.gmra.mxu0 %v257
  %v636 = vpop.f32.mrf.mxu0
  %v637 = vadd.f32 0.0, %v636
  %v638 = vpop.f32.mrf.mxu0
  %639 = vmatprep.mubr.f32.mxu0 0.0
  %640 = vmatmul.mubr.f32.gmra.mxu0 %v260
  %v641 = vpop.f32.mrf.mxu0
  %v642 = vadd.f32 0.0, %v641
  %v643 = vpop.f32.mrf.mxu0
  %644 = vmatprep.mubr.f32.mxu0 0.0
  %645 = vmatmul.mubr.f32.gmra.mxu0 %v263
  %v646 = vpop.f32.mrf.mxu0
  %v647 = vadd.f32 0.0, %v646
  %v648 = vpop.f32.mrf.mxu0
  %649 = vmatprep.mubr.f32.mxu0 0.0
  %650 = vmatmul.mubr.f32.gmra.mxu0 %v266
  %v651 = vpop.f32.mrf.mxu0
  %v652 = vadd.f32 0.0, %v651
  %v653 = vpop.f32.mrf.mxu0
  %654 = vmatprep.mubr.f32.mxu0 0.0
  %655 = vmatmul.mubr.f32.gmra.mxu0 %v269
  %v656 = vpop.f32.mrf.mxu0
  %v657 = vadd.f32 0.0, %v656
  %v658 = vpop.f32.mrf.mxu0
  %659 = vdwg.mxu0
  %vm660 = vcmask 39936
  %v661 = vsel %vm660, %v11, -inf
  %662 = vmax.xlane.f32.xlu0 %v661
  %v663 = vpop.xlane.xlu0 %662
  %v664 = vsel %vm660, %v12, -inf
  %665 = vmax.xlane.f32.xlu0 %v664
  %v666 = vpop.xlane.xlu0 %665
  %v667 = vsel %vm660, %v13, -inf
  %668 = vmax.xlane.f32.xlu0 %v667
  %v669 = vpop.xlane.xlu0 %668
  %v670 = vsel %vm660, %v14, -inf
  %671 = vmax.xlane.f32.xlu0 %v670
  %v672 = vpop.xlane.xlu0 %671
  %v673 = vsel %vm660, %v15, -inf
  %674 = vmax.xlane.f32.xlu0 %v673
  %v675 = vpop.xlane.xlu0 %674
  %v676 = vsel %vm660, %v16, -inf
  %677 = vmax.xlane.f32.xlu0 %v676
  %v678 = vpop.xlane.xlu0 %677
  %v679 = vsel %vm660, %v17, -inf
  %680 = vmax.xlane.f32.xlu0 %v679
  %v681 = vpop.xlane.xlu0 %680
  %v682 = vsel %vm660, %v18, -inf
  %683 = vmax.xlane.f32.xlu0 %v682
  %v684 = vpop.xlane.xlu0 %683
  %v685 = vsel %vm660, %v19, -inf
  %686 = vmax.xlane.f32.xlu0 %v685
  %v687 = vpop.xlane.xlu0 %686
  %v688 = vsel %vm660, %v20, -inf
  %689 = vmax.xlane.f32.xlu0 %v688
  %v690 = vpop.xlane.xlu0 %689
  %v691 = vsel %vm660, %v21, -inf
  %692 = vmax.xlane.f32.xlu0 %v691
  %v693 = vpop.xlane.xlu0 %692
  %v694 = vsel %vm660, %v22, -inf
  %695 = vmax.xlane.f32.xlu0 %v694
  %v696 = vpop.xlane.xlu0 %695
  %v697 = vsel %vm660, %v23, -inf
  %698 = vmax.xlane.f32.xlu0 %v697
  %v699 = vpop.xlane.xlu0 %698
  %v700 = vsel %vm660, %v24, -inf
  %701 = vmax.xlane.f32.xlu0 %v700
  %v702 = vpop.xlane.xlu0 %701
  %v703 = vsel %vm660, %v25, -inf
  %704 = vmax.xlane.f32.xlu0 %v703
  %v705 = vpop.xlane.xlu0 %704
  %v706 = vsel %vm660, %v26, -inf
  %707 = vmax.xlane.f32.xlu0 %v706
  %v708 = vpop.xlane.xlu0 %707
  %v709 = vsel %vm660, %v27, -inf
  %710 = vmax.xlane.f32.xlu0 %v709
  %v711 = vpop.xlane.xlu0 %710
  %v712 = vsel %vm660, %v28, -inf
  %713 = vmax.xlane.f32.xlu0 %v712
  %v714 = vpop.xlane.xlu0 %713
  %v715 = vsel %vm660, %v29, -inf
  %716 = vmax.xlane.f32.xlu0 %v715
  %v717 = vpop.xlane.xlu0 %716
  %v718 = vsel %vm660, %v30, -inf
  %719 = vmax.xlane.f32.xlu0 %v718
  %v720 = vpop.xlane.xlu0 %719
  %v721 = vsel %vm660, %v31, -inf
  %722 = vmax.xlane.f32.xlu0 %v721
  %v723 = vpop.xlane.xlu0 %722
  %v724 = vsel %vm660, %v32, -inf
  %725 = vmax.xlane.f32.xlu0 %v724
  %v726 = vpop.xlane.xlu0 %725
  %v727 = vsel %vm660, %v33, -inf
  %728 = vmax.xlane.f32.xlu0 %v727
  %v729 = vpop.xlane.xlu0 %728
  %v730 = vsel %vm660, %v34, -inf
  %731 = vmax.xlane.f32.xlu0 %v730
  %v732 = vpop.xlane.xlu0 %731
  %v733 = vsel %vm660, %v35, -inf
  %734 = vmax.xlane.f32.xlu0 %v733
  %v735 = vpop.xlane.xlu0 %734
  %v736 = vsel %vm660, %v36, -inf
  %737 = vmax.xlane.f32.xlu0 %v736
  %v738 = vpop.xlane.xlu0 %737
  %v739 = vsel %vm660, %v37, -inf
  %740 = vmax.xlane.f32.xlu0 %v739
  %v741 = vpop.xlane.xlu0 %740
  %v742 = vsel %vm660, %v38, -inf
  %743 = vmax.xlane.f32.xlu0 %v742
  %v744 = vpop.xlane.xlu0 %743
  %v745 = vsel %vm660, %v39, -inf
  %746 = vmax.xlane.f32.xlu0 %v745
  %v747 = vpop.xlane.xlu0 %746
  %v748 = vsel %vm660, %v40, -inf
  %749 = vmax.xlane.f32.xlu0 %v748
  %v750 = vpop.xlane.xlu0 %749
  %v751 = vsel %vm660, %v41, -inf
  %752 = vmax.xlane.f32.xlu0 %v751
  %v753 = vpop.xlane.xlu0 %752
  %v754 = vsel %vm660, %v42, -inf
  %755 = vmax.xlane.f32.xlu0 %v754
  %v756 = vpop.xlane.xlu0 %755
  %v757 = vsel %vm660, %v43, -inf
  %758 = vmax.xlane.f32.xlu0 %v757
  %v759 = vpop.xlane.xlu0 %758
  %v760 = vsel %vm660, %v44, -inf
  %761 = vmax.xlane.f32.xlu0 %v760
  %v762 = vpop.xlane.xlu0 %761
  %v763 = vsel %vm660, %v45, -inf
  %764 = vmax.xlane.f32.xlu0 %v763
  %v765 = vpop.xlane.xlu0 %764
  %v766 = vsel %vm660, %v46, -inf
  %767 = vmax.xlane.f32.xlu0 %v766
  %v768 = vpop.xlane.xlu0 %767
  %v769 = vsel %vm660, %v47, -inf
  %770 = vmax.xlane.f32.xlu0 %v769
  %v771 = vpop.xlane.xlu0 %770
  %v772 = vsel %vm660, %v48, -inf
  %773 = vmax.xlane.f32.xlu0 %v772
  %v774 = vpop.xlane.xlu0 %773
  %v775 = vsel %vm660, %v49, -inf
  %776 = vmax.xlane.f32.xlu0 %v775
  %v777 = vpop.xlane.xlu0 %776
  %v778 = vsel %vm660, %v50, -inf
  %779 = vmax.xlane.f32.xlu0 %v778
  %v780 = vpop.xlane.xlu0 %779
  %v781 = vsel %vm660, %v51, -inf
  %782 = vmax.xlane.f32.xlu0 %v781
  %v783 = vpop.xlane.xlu0 %782
  %v784 = vsel %vm660, %v52, -inf
  %785 = vmax.xlane.f32.xlu0 %v784
  %v786 = vpop.xlane.xlu0 %785
  %v787 = vsel %vm660, %v53, -inf
  %788 = vmax.xlane.f32.xlu0 %v787
  %v789 = vpop.xlane.xlu0 %788
  %v790 = vsel %vm660, %v54, -inf
  %791 = vmax.xlane.f32.xlu0 %v790
  %v792 = vpop.xlane.xlu0 %791
  %v793 = vsel %vm660, %v55, -inf
  %794 = vmax.xlane.f32.xlu0 %v793
  %v795 = vpop.xlane.xlu0 %794
  %v796 = vsel %vm660, %v56, -inf
  %797 = vmax.xlane.f32.xlu0 %v796
  %v798 = vpop.xlane.xlu0 %797
  %v799 = vsel %vm660, %v57, -inf
  %800 = vmax.xlane.f32.xlu0 %v799
  %v801 = vpop.xlane.xlu0 %800
  %v802 = vsel %vm660, %v58, -inf
  %803 = vmax.xlane.f32.xlu0 %v802
  %v804 = vpop.xlane.xlu0 %803
  %v805 = vsel %vm660, %v59, -inf
  %806 = vmax.xlane.f32.xlu0 %v805
  %v807 = vpop.xlane.xlu0 %806
  %v808 = vsel %vm660, %v60, -inf
  %809 = vmax.xlane.f32.xlu0 %v808
  %v810 = vpop.xlane.xlu0 %809
  %v811 = vsel %vm660, %v61, -inf
  %812 = vmax.xlane.f32.xlu0 %v811
  %v813 = vpop.xlane.xlu0 %812
  %v814 = vsel %vm660, %v62, -inf
  %815 = vmax.xlane.f32.xlu0 %v814
  %v816 = vpop.xlane.xlu0 %815
  %v817 = vsel %vm660, %v63, -inf
  %818 = vmax.xlane.f32.xlu0 %v817
  %v819 = vpop.xlane.xlu0 %818
  %v820 = vsel %vm660, %v64, -inf
  %821 = vmax.xlane.f32.xlu0 %v820
  %v822 = vpop.xlane.xlu0 %821
  %v823 = vsel %vm660, %v65, -inf
  %824 = vmax.xlane.f32.xlu0 %v823
  %v825 = vpop.xlane.xlu0 %824
  %v826 = vsel %vm660, %v66, -inf
  %827 = vmax.xlane.f32.xlu0 %v826
  %v828 = vpop.xlane.xlu0 %827
  %v829 = vsel %vm660, %v67, -inf
  %830 = vmax.xlane.f32.xlu0 %v829
  %v831 = vpop.xlane.xlu0 %830
  %v832 = vsel %vm660, %v68, -inf
  %833 = vmax.xlane.f32.xlu0 %v832
  %v834 = vpop.xlane.xlu0 %833
  %v835 = vsel %vm660, %v69, -inf
  %836 = vmax.xlane.f32.xlu0 %v835
  %v837 = vpop.xlane.xlu0 %836
  %v838 = vsel %vm660, %v70, -inf
  %839 = vmax.xlane.f32.xlu0 %v838
  %v840 = vpop.xlane.xlu0 %839
  %v841 = vsel %vm660, %v71, -inf
  %842 = vmax.xlane.f32.xlu0 %v841
  %v843 = vpop.xlane.xlu0 %842
  %v844 = vsel %vm660, %v72, -inf
  %845 = vmax.xlane.f32.xlu0 %v844
  %v846 = vpop.xlane.xlu0 %845
  %v847 = vsel %vm660, %v73, -inf
  %848 = vmax.xlane.f32.xlu0 %v847
  %v849 = vpop.xlane.xlu0 %848
  %v850 = vsel %vm660, %v74, -inf
  %851 = vmax.xlane.f32.xlu0 %v850
  %v852 = vpop.xlane.xlu0 %851
  %vm853 = vcmask 80936
  %v854 = vsel %vm853, %v11, -inf
  %855 = vmax.xlane.f32.xlu0 %v854
  %v856 = vpop.xlane.xlu0 %855
  %v857 = vsel %vm853, %v12, -inf
  %858 = vmax.xlane.f32.xlu0 %v857
  %v859 = vpop.xlane.xlu0 %858
  %v860 = vsel %vm853, %v13, -inf
  %861 = vmax.xlane.f32.xlu0 %v860
  %v862 = vpop.xlane.xlu0 %861
  %v863 = vsel %vm853, %v14, -inf
  %864 = vmax.xlane.f32.xlu0 %v863
  %v865 = vpop.xlane.xlu0 %864
  %v866 = vsel %vm853, %v15, -inf
  %867 = vmax.xlane.f32.xlu0 %v866
  %v868 = vpop.xlane.xlu0 %867
  %v869 = vsel %vm853, %v16, -inf
  %870 = vmax.xlane.f32.xlu0 %v869
  %v871 = vpop.xlane.xlu0 %870
  %v872 = vsel %vm853, %v17, -inf
  %873 = vmax.xlane.f32.xlu0 %v872
  %v874 = vpop.xlane.xlu0 %873
  %v875 = vsel %vm853, %v18, -inf
  %876 = vmax.xlane.f32.xlu0 %v875
  %v877 = vpop.xlane.xlu0 %876
  %v878 = vsel %vm853, %v19, -inf
  %879 = vmax.xlane.f32.xlu0 %v878
  %v880 = vpop.xlane.xlu0 %879
  %v881 = vsel %vm853, %v20, -inf
  %882 = vmax.xlane.f32.xlu0 %v881
  %v883 = vpop.xlane.xlu0 %882
  %v884 = vsel %vm853, %v21, -inf
  %885 = vmax.xlane.f32.xlu0 %v884
  %v886 = vpop.xlane.xlu0 %885
  %v887 = vsel %vm853, %v22, -inf
  %888 = vmax.xlane.f32.xlu0 %v887
  %v889 = vpop.xlane.xlu0 %888
  %v890 = vsel %vm853, %v23, -inf
  %891 = vmax.xlane.f32.xlu0 %v890
  %v892 = vpop.xlane.xlu0 %891
  %v893 = vsel %vm853, %v24, -inf
  %894 = vmax.xlane.f32.xlu0 %v893
  %v895 = vpop.xlane.xlu0 %894
  %v896 = vsel %vm853, %v25, -inf
  %897 = vmax.xlane.f32.xlu0 %v896
  %v898 = vpop.xlane.xlu0 %897
  %v899 = vsel %vm853, %v26, -inf
  %900 = vmax.xlane.f32.xlu0 %v899
  %v901 = vpop.xlane.xlu0 %900
  %v902 = vsel %vm853, %v27, -inf
  %903 = vmax.xlane.f32.xlu0 %v902
  %v904 = vpop.xlane.xlu0 %903
  %v905 = vsel %vm853, %v28, -inf
  %906 = vmax.xlane.f32.xlu0 %v905
  %v907 = vpop.xlane.xlu0 %906
  %v908 = vsel %vm853, %v29, -inf
  %909 = vmax.xlane.f32.xlu0 %v908
  %v910 = vpop.xlane.xlu0 %909
  %v911 = vsel %vm853, %v30, -inf
  %912 = vmax.xlane.f32.xlu0 %v911
  %v913 = vpop.xlane.xlu0 %912
  %v914 = vsel %vm853, %v31, -inf
  %915 = vmax.xlane.f32.xlu0 %v914
  %v916 = vpop.xlane.xlu0 %915
  %v917 = vsel %vm853, %v32, -inf
  %918 = vmax.xlane.f32.xlu0 %v917
  %v919 = vpop.xlane.xlu0 %918
  %v920 = vsel %vm853, %v33, -inf
  %921 = vmax.xlane.f32.xlu0 %v920
  %v922 = vpop.xlane.xlu0 %921
  %v923 = vsel %vm853, %v34, -inf
  %924 = vmax.xlane.f32.xlu0 %v923
  %v925 = vpop.xlane.xlu0 %924
  %v926 = vsel %vm853, %v35, -inf
  %927 = vmax.xlane.f32.xlu0 %v926
  %v928 = vpop.xlane.xlu0 %927
  %v929 = vsel %vm853, %v36, -inf
  %930 = vmax.xlane.f32.xlu0 %v929
  %v931 = vpop.xlane.xlu0 %930
  %v932 = vsel %vm853, %v37, -inf
  %933 = vmax.xlane.f32.xlu0 %v932
  %v934 = vpop.xlane.xlu0 %933
  %v935 = vsel %vm853, %v38, -inf
  %936 = vmax.xlane.f32.xlu0 %v935
  %v937 = vpop.xlane.xlu0 %936
  %v938 = vsel %vm853, %v39, -inf
  %939 = vmax.xlane.f32.xlu0 %v938
  %v940 = vpop.xlane.xlu0 %939
  %v941 = vsel %vm853, %v40, -inf
  %942 = vmax.xlane.f32.xlu0 %v941
  %v943 = vpop.xlane.xlu0 %942
  %v944 = vsel %vm853, %v41, -inf
  %945 = vmax.xlane.f32.xlu0 %v944
  %v946 = vpop.xlane.xlu0 %945
  %v947 = vsel %vm853, %v42, -inf
  %948 = vmax.xlane.f32.xlu0 %v947
  %v949 = vpop.xlane.xlu0 %948
  %v950 = vsel %vm853, %v43, -inf
  %951 = vmax.xlane.f32.xlu0 %v950
  %v952 = vpop.xlane.xlu0 %951
  %v953 = vsel %vm853, %v44, -inf
  %954 = vmax.xlane.f32.xlu0 %v953
  %v955 = vpop.xlane.xlu0 %954
  %v956 = vsel %vm853, %v45, -inf
  %957 = vmax.xlane.f32.xlu0 %v956
  %v958 = vpop.xlane.xlu0 %957
  %v959 = vsel %vm853, %v46, -inf
  %960 = vmax.xlane.f32.xlu0 %v959
  %v961 = vpop.xlane.xlu0 %960
  %v962 = vsel %vm853, %v47, -inf
  %963 = vmax.xlane.f32.xlu0 %v962
  %v964 = vpop.xlane.xlu0 %963
  %v965 = vsel %vm853, %v48, -inf
  %966 = vmax.xlane.f32.xlu0 %v965
  %v967 = vpop.xlane.xlu0 %966
  %v968 = vsel %vm853, %v49, -inf
  %969 = vmax.xlane.f32.xlu0 %v968
  %v970 = vpop.xlane.xlu0 %969
  %v971 = vsel %vm853, %v50, -inf
  %972 = vmax.xlane.f32.xlu0 %v971
  %v973 = vpop.xlane.xlu0 %972
  %v974 = vsel %vm853, %v51, -inf
  %975 = vmax.xlane.f32.xlu0 %v974
  %v976 = vpop.xlane.xlu0 %975
  %v977 = vsel %vm853, %v52, -inf
  %978 = vmax.xlane.f32.xlu0 %v977
  %v979 = vpop.xlane.xlu0 %978
  %v980 = vsel %vm853, %v53, -inf
  %981 = vmax.xlane.f32.xlu0 %v980
  %v982 = vpop.xlane.xlu0 %981
  %v983 = vsel %vm853, %v54, -inf
  %984 = vmax.xlane.f32.xlu0 %v983
  %v985 = vpop.xlane.xlu0 %984
  %v986 = vsel %vm853, %v55, -inf
  %987 = vmax.xlane.f32.xlu0 %v986
  %v988 = vpop.xlane.xlu0 %987
  %v989 = vsel %vm853, %v56, -inf
  %990 = vmax.xlane.f32.xlu0 %v989
  %v991 = vpop.xlane.xlu0 %990
  %v992 = vsel %vm853, %v57, -inf
  %993 = vmax.xlane.f32.xlu0 %v992
  %v994 = vpop.xlane.xlu0 %993
  %v995 = vsel %vm853, %v58, -inf
  %996 = vmax.xlane.f32.xlu0 %v995
  %v997 = vpop.xlane.xlu0 %996
  %v998 = vsel %vm853, %v59, -inf
  %999 = vmax.xlane.f32.xlu0 %v998
  %v1000 = vpop.xlane.xlu0 %999
  %v1001 = vsel %vm853, %v60, -inf
  %1002 = vmax.xlane.f32.xlu0 %v1001
  %v1003 = vpop.xlane.xlu0 %1002
  %v1004 = vsel %vm853, %v61, -inf
  %1005 = vmax.xlane.f32.xlu0 %v1004
  %v1006 = vpop.xlane.xlu0 %1005
  %v1007 = vsel %vm853, %v62, -inf
  %1008 = vmax.xlane.f32.xlu0 %v1007
  %v1009 = vpop.xlane.xlu0 %1008
  %v1010 = vsel %vm853, %v63, -inf
  %1011 = vmax.xlane.f32.xlu0 %v1010
  %v1012 = vpop.xlane.xlu0 %1011
  %v1013 = vsel %vm853, %v64, -inf
  %1014 = vmax.xlane.f32.xlu0 %v1013
  %v1015 = vpop.xlane.xlu0 %1014
  %v1016 = vsel %vm853, %v65, -inf
  %1017 = vmax.xlane.f32.xlu0 %v1016
  %v1018 = vpop.xlane.xlu0 %1017
  %v1019 = vsel %vm853, %v66, -inf
  %1020 = vmax.xlane.f32.xlu0 %v1019
  %v1021 = vpop.xlane.xlu0 %1020
  %v1022 = vsel %vm853, %v67, -inf
  %1023 = vmax.xlane.f32.xlu0 %v1022
  %v1024 = vpop.xlane.xlu0 %1023
  %v1025 = vsel %vm853, %v68, -inf
  %1026 = vmax.xlane.f32.xlu0 %v1025
  %v1027 = vpop.xlane.xlu0 %1026
  %v1028 = vsel %vm853, %v69, -inf
  %1029 = vmax.xlane.f32.xlu0 %v1028
  %v1030 = vpop.xlane.xlu0 %1029
  %v1031 = vsel %vm853, %v70, -inf
  %1032 = vmax.xlane.f32.xlu0 %v1031
  %v1033 = vpop.xlane.xlu0 %1032
  %v1034 = vsel %vm853, %v71, -inf
  %1035 = vmax.xlane.f32.xlu0 %v1034
  %v1036 = vpop.xlane.xlu0 %1035
  %v1037 = vsel %vm853, %v72, -inf
  %1038 = vmax.xlane.f32.xlu0 %v1037
  %v1039 = vpop.xlane.xlu0 %1038
  %v1040 = vsel %vm853, %v73, -inf
  %1041 = vmax.xlane.f32.xlu0 %v1040
  %v1042 = vpop.xlane.xlu0 %1041
  %v1043 = vsel %vm853, %v74, -inf
  %1044 = vmax.xlane.f32.xlu0 %v1043
  %v1045 = vpop.xlane.xlu0 %1044
  %vm1046 = vcmask 121936
  %v1047 = vsel %vm1046, %v11, -inf
  %1048 = vmax.xlane.f32.xlu0 %v1047
  %v1049 = vpop.xlane.xlu0 %1048
  %v1050 = vsel %vm1046, %v12, -inf
  %1051 = vmax.xlane.f32.xlu0 %v1050
  %v1052 = vpop.xlane.xlu0 %1051
  %v1053 = vsel %vm1046, %v13, -inf
  %1054 = vmax.xlane.f32.xlu0 %v1053
  %v1055 = vpop.xlane.xlu0 %1054
  %v1056 = vsel %vm1046, %v14, -inf
  %1057 = vmax.xlane.f32.xlu0 %v1056
  %v1058 = vpop.xlane.xlu0 %1057
  %v1059 = vsel %vm1046, %v15, -inf
  %1060 = vmax.xlane.f32.xlu0 %v1059
  %v1061 = vpop.xlane.xlu0 %1060
  %v1062 = vsel %vm1046, %v16, -inf
  %1063 = vmax.xlane.f32.xlu0 %v1062
  %v1064 = vpop.xlane.xlu0 %1063
  %v1065 = vsel %vm1046, %v17, -inf
  %1066 = vmax.xlane.f32.xlu0 %v1065
  %v1067 = vpop.xlane.xlu0 %1066
  %v1068 = vsel %vm1046, %v18, -inf
  %1069 = vmax.xlane.f32.xlu0 %v1068
  %v1070 = vpop.xlane.xlu0 %1069
  %v1071 = vsel %vm1046, %v19, -inf
  %1072 = vmax.xlane.f32.xlu0 %v1071
  %v1073 = vpop.xlane.xlu0 %1072
  %v1074 = vsel %vm1046, %v20, -inf
  %1075 = vmax.xlane.f32.xlu0 %v1074
  %v1076 = vpop.xlane.xlu0 %1075
  %v1077 = vsel %vm1046, %v21, -inf
  %1078 = vmax.xlane.f32.xlu0 %v1077
  %v1079 = vpop.xlane.xlu0 %1078
  %v1080 = vsel %vm1046, %v22, -inf
  %1081 = vmax.xlane.f32.xlu0 %v1080
  %v1082 = vpop.xlane.xlu0 %1081
  %v1083 = vsel %vm1046, %v23, -inf
  %1084 = vmax.xlane.f32.xlu0 %v1083
  %v1085 = vpop.xlane.xlu0 %1084
  %v1086 = vsel %vm1046, %v24, -inf
  %1087 = vmax.xlane.f32.xlu0 %v1086
  %v1088 = vpop.xlane.xlu0 %1087
  %v1089 = vsel %vm1046, %v25, -inf
  %1090 = vmax.xlane.f32.xlu0 %v1089
  %v1091 = vpop.xlane.xlu0 %1090
  %v1092 = vsel %vm1046, %v26, -inf
  %1093 = vmax.xlane.f32.xlu0 %v1092
  %v1094 = vpop.xlane.xlu0 %1093
  %v1095 = vsel %vm1046, %v27, -inf
  %1096 = vmax.xlane.f32.xlu0 %v1095
  %v1097 = vpop.xlane.xlu0 %1096
  %v1098 = vsel %vm1046, %v28, -inf
  %1099 = vmax.xlane.f32.xlu0 %v1098
  %v1100 = vpop.xlane.xlu0 %1099
  %v1101 = vsel %vm1046, %v29, -inf
  %1102 = vmax.xlane.f32.xlu0 %v1101
  %v1103 = vpop.xlane.xlu0 %1102
  %v1104 = vsel %vm1046, %v30, -inf
  %1105 = vmax.xlane.f32.xlu0 %v1104
  %v1106 = vpop.xlane.xlu0 %1105
  %v1107 = vsel %vm1046, %v31, -inf
  %1108 = vmax.xlane.f32.xlu0 %v1107
  %v1109 = vpop.xlane.xlu0 %1108
  %v1110 = vsel %vm1046, %v32, -inf
  %1111 = vmax.xlane.f32.xlu0 %v1110
  %v1112 = vpop.xlane.xlu0 %1111
  %v1113 = vsel %vm1046, %v33, -inf
  %1114 = vmax.xlane.f32.xlu0 %v1113
  %v1115 = vpop.xlane.xlu0 %1114
  %v1116 = vsel %vm1046, %v34, -inf
  %1117 = vmax.xlane.f32.xlu0 %v1116
  %v1118 = vpop.xlane.xlu0 %1117
  %v1119 = vsel %vm1046, %v35, -inf
  %1120 = vmax.xlane.f32.xlu0 %v1119
  %v1121 = vpop.xlane.xlu0 %1120
  %v1122 = vsel %vm1046, %v36, -inf
  %1123 = vmax.xlane.f32.xlu0 %v1122
  %v1124 = vpop.xlane.xlu0 %1123
  %v1125 = vsel %vm1046, %v37, -inf
  %1126 = vmax.xlane.f32.xlu0 %v1125
  %v1127 = vpop.xlane.xlu0 %1126
  %v1128 = vsel %vm1046, %v38, -inf
  %1129 = vmax.xlane.f32.xlu0 %v1128
  %v1130 = vpop.xlane.xlu0 %1129
  %v1131 = vsel %vm1046, %v39, -inf
  %1132 = vmax.xlane.f32.xlu0 %v1131
  %v1133 = vpop.xlane.xlu0 %1132
  %v1134 = vsel %vm1046, %v40, -inf
  %1135 = vmax.xlane.f32.xlu0 %v1134
  %v1136 = vpop.xlane.xlu0 %1135
  %v1137 = vsel %vm1046, %v41, -inf
  %1138 = vmax.xlane.f32.xlu0 %v1137
  %v1139 = vpop.xlane.xlu0 %1138
  %v1140 = vsel %vm1046, %v42, -inf
  %1141 = vmax.xlane.f32.xlu0 %v1140
  %v1142 = vpop.xlane.xlu0 %1141
  %v1143 = vsel %vm1046, %v43, -inf
  %1144 = vmax.xlane.f32.xlu0 %v1143
  %v1145 = vpop.xlane.xlu0 %1144
  %v1146 = vsel %vm1046, %v44, -inf
  %1147 = vmax.xlane.f32.xlu0 %v1146
  %v1148 = vpop.xlane.xlu0 %1147
  %v1149 = vsel %vm1046, %v45, -inf
  %1150 = vmax.xlane.f32.xlu0 %v1149
  %v1151 = vpop.xlane.xlu0 %1150
  %v1152 = vsel %vm1046, %v46, -inf
  %1153 = vmax.xlane.f32.xlu0 %v1152
  %v1154 = vpop.xlane.xlu0 %1153
  %v1155 = vsel %vm1046, %v47, -inf
  %1156 = vmax.xlane.f32.xlu0 %v1155
  %v1157 = vpop.xlane.xlu0 %1156
  %v1158 = vsel %vm1046, %v48, -inf
  %1159 = vmax.xlane.f32.xlu0 %v1158
  %v1160 = vpop.xlane.xlu0 %1159
  %v1161 = vsel %vm1046, %v49, -inf
  %1162 = vmax.xlane.f32.xlu0 %v1161
  %v1163 = vpop.xlane.xlu0 %1162
  %v1164 = vsel %vm1046, %v50, -inf
  %1165 = vmax.xlane.f32.xlu0 %v1164
  %v1166 = vpop.xlane.xlu0 %1165
  %v1167 = vsel %vm1046, %v51, -inf
  %1168 = vmax.xlane.f32.xlu0 %v1167
  %v1169 = vpop.xlane.xlu0 %1168
  %v1170 = vsel %vm1046, %v52, -inf
  %1171 = vmax.xlane.f32.xlu0 %v1170
  %v1172 = vpop.xlane.xlu0 %1171
  %v1173 = vsel %vm1046, %v53, -inf
  %1174 = vmax.xlane.f32.xlu0 %v1173
  %v1175 = vpop.xlane.xlu0 %1174
  %v1176 = vsel %vm1046, %v54, -inf
  %1177 = vmax.xlane.f32.xlu0 %v1176
  %v1178 = vpop.xlane.xlu0 %1177
  %v1179 = vsel %vm1046, %v55, -inf
  %1180 = vmax.xlane.f32.xlu0 %v1179
  %v1181 = vpop.xlane.xlu0 %1180
  %v1182 = vsel %vm1046, %v56, -inf
  %1183 = vmax.xlane.f32.xlu0 %v1182
  %v1184 = vpop.xlane.xlu0 %1183
  %v1185 = vsel %vm1046, %v57, -inf
  %1186 = vmax.xlane.f32.xlu0 %v1185
  %v1187 = vpop.xlane.xlu0 %1186
  %v1188 = vsel %vm1046, %v58, -inf
  %1189 = vmax.xlane.f32.xlu0 %v1188
  %v1190 = vpop.xlane.xlu0 %1189
  %v1191 = vsel %vm1046, %v59, -inf
  %1192 = vmax.xlane.f32.xlu0 %v1191
  %v1193 = vpop.xlane.xlu0 %1192
  %v1194 = vsel %vm1046, %v60, -inf
  %1195 = vmax.xlane.f32.xlu0 %v1194
  %v1196 = vpop.xlane.xlu0 %1195
  %v1197 = vsel %vm1046, %v61, -inf
  %1198 = vmax.xlane.f32.xlu0 %v1197
  %v1199 = vpop.xlane.xlu0 %1198
  %v1200 = vsel %vm1046, %v62, -inf
  %1201 = vmax.xlane.f32.xlu0 %v1200
  %v1202 = vpop.xlane.xlu0 %1201
  %v1203 = vsel %vm1046, %v63, -inf
  %1204 = vmax.xlane.f32.xlu0 %v1203
  %v1205 = vpop.xlane.xlu0 %1204
  %v1206 = vsel %vm1046, %v64, -inf
  %1207 = vmax.xlane.f32.xlu0 %v1206
  %v1208 = vpop.xlane.xlu0 %1207
  %v1209 = vsel %vm1046, %v65, -inf
  %1210 = vmax.xlane.f32.xlu0 %v1209
  %v1211 = vpop.xlane.xlu0 %1210
  %v1212 = vsel %vm1046, %v66, -inf
  %1213 = vmax.xlane.f32.xlu0 %v1212
  %v1214 = vpop.xlane.xlu0 %1213
  %v1215 = vsel %vm1046, %v67, -inf
  %1216 = vmax.xlane.f32.xlu0 %v1215
  %v1217 = vpop.xlane.xlu0 %1216
  %v1218 = vsel %vm1046, %v68, -inf
  %1219 = vmax.xlane.f32.xlu0 %v1218
  %v1220 = vpop.xlane.xlu0 %1219
  %v1221 = vsel %vm1046, %v69, -inf
  %1222 = vmax.xlane.f32.xlu0 %v1221
  %v1223 = vpop.xlane.xlu0 %1222
  %v1224 = vsel %vm1046, %v70, -inf
  %1225 = vmax.xlane.f32.xlu0 %v1224
  %v1226 = vpop.xlane.xlu0 %1225
  %v1227 = vsel %vm1046, %v71, -inf
  %1228 = vmax.xlane.f32.xlu0 %v1227
  %v1229 = vpop.xlane.xlu0 %1228
  %v1230 = vsel %vm1046, %v72, -inf
  %1231 = vmax.xlane.f32.xlu0 %v1230
  %v1232 = vpop.xlane.xlu0 %1231
  %v1233 = vsel %vm1046, %v73, -inf
  %1234 = vmax.xlane.f32.xlu0 %v1233
  %v1235 = vpop.xlane.xlu0 %1234
  %v1236 = vsel %vm1046, %v74, -inf
  %1237 = vmax.xlane.f32.xlu0 %v1236
  %v1238 = vpop.xlane.xlu0 %1237
  %vm1239 = vcmask 162936
  %v1240 = vsel %vm1239, %v11, -inf
  %1241 = vmax.xlane.f32.xlu0 %v1240
  %v1242 = vpop.xlane.xlu0 %1241
  %v1243 = vsel %vm1239, %v12, -inf
  %1244 = vmax.xlane.f32.xlu0 %v1243
  %v1245 = vpop.xlane.xlu0 %1244
  %v1246 = vsel %vm1239, %v13, -inf
  %1247 = vmax.xlane.f32.xlu0 %v1246
  %v1248 = vpop.xlane.xlu0 %1247
  %v1249 = vsel %vm1239, %v14, -inf
  %1250 = vmax.xlane.f32.xlu0 %v1249
  %v1251 = vpop.xlane.xlu0 %1250
  %v1252 = vsel %vm1239, %v15, -inf
  %1253 = vmax.xlane.f32.xlu0 %v1252
  %v1254 = vpop.xlane.xlu0 %1253
  %v1255 = vsel %vm1239, %v16, -inf
  %1256 = vmax.xlane.f32.xlu0 %v1255
  %v1257 = vpop.xlane.xlu0 %1256
  %v1258 = vsel %vm1239, %v17, -inf
  %1259 = vmax.xlane.f32.xlu0 %v1258
  %v1260 = vpop.xlane.xlu0 %1259
  %v1261 = vsel %vm1239, %v18, -inf
  %1262 = vmax.xlane.f32.xlu0 %v1261
  %v1263 = vpop.xlane.xlu0 %1262
  %v1264 = vsel %vm1239, %v19, -inf
  %1265 = vmax.xlane.f32.xlu0 %v1264
  %v1266 = vpop.xlane.xlu0 %1265
  %v1267 = vsel %vm1239, %v20, -inf
  %1268 = vmax.xlane.f32.xlu0 %v1267
  %v1269 = vpop.xlane.xlu0 %1268
  %v1270 = vsel %vm1239, %v21, -inf
  %1271 = vmax.xlane.f32.xlu0 %v1270
  %v1272 = vpop.xlane.xlu0 %1271
  %v1273 = vsel %vm1239, %v22, -inf
  %1274 = vmax.xlane.f32.xlu0 %v1273
  %v1275 = vpop.xlane.xlu0 %1274
  %v1276 = vsel %vm1239, %v23, -inf
  %1277 = vmax.xlane.f32.xlu0 %v1276
  %v1278 = vpop.xlane.xlu0 %1277
  %v1279 = vsel %vm1239, %v24, -inf
  %1280 = vmax.xlane.f32.xlu0 %v1279
  %v1281 = vpop.xlane.xlu0 %1280
  %v1282 = vsel %vm1239, %v25, -inf
  %1283 = vmax.xlane.f32.xlu0 %v1282
  %v1284 = vpop.xlane.xlu0 %1283
  %v1285 = vsel %vm1239, %v26, -inf
  %1286 = vmax.xlane.f32.xlu0 %v1285
  %v1287 = vpop.xlane.xlu0 %1286
  %v1288 = vsel %vm1239, %v27, -inf
  %1289 = vmax.xlane.f32.xlu0 %v1288
  %v1290 = vpop.xlane.xlu0 %1289
  %v1291 = vsel %vm1239, %v28, -inf
  %1292 = vmax.xlane.f32.xlu0 %v1291
  %v1293 = vpop.xlane.xlu0 %1292
  %v1294 = vsel %vm1239, %v29, -inf
  %1295 = vmax.xlane.f32.xlu0 %v1294
  %v1296 = vpop.xlane.xlu0 %1295
  %v1297 = vsel %vm1239, %v30, -inf
  %1298 = vmax.xlane.f32.xlu0 %v1297
  %v1299 = vpop.xlane.xlu0 %1298
  %v1300 = vsel %vm1239, %v31, -inf
  %1301 = vmax.xlane.f32.xlu0 %v1300
  %v1302 = vpop.xlane.xlu0 %1301
  %v1303 = vsel %vm1239, %v32, -inf
  %1304 = vmax.xlane.f32.xlu0 %v1303
  %v1305 = vpop.xlane.xlu0 %1304
  %v1306 = vsel %vm1239, %v33, -inf
  %1307 = vmax.xlane.f32.xlu0 %v1306
  %v1308 = vpop.xlane.xlu0 %1307
  %v1309 = vsel %vm1239, %v34, -inf
  %1310 = vmax.xlane.f32.xlu0 %v1309
  %v1311 = vpop.xlane.xlu0 %1310
  %v1312 = vsel %vm1239, %v35, -inf
  %1313 = vmax.xlane.f32.xlu0 %v1312
  %v1314 = vpop.xlane.xlu0 %1313
  %v1315 = vsel %vm1239, %v36, -inf
  %1316 = vmax.xlane.f32.xlu0 %v1315
  %v1317 = vpop.xlane.xlu0 %1316
  %v1318 = vsel %vm1239, %v37, -inf
  %1319 = vmax.xlane.f32.xlu0 %v1318
  %v1320 = vpop.xlane.xlu0 %1319
  %v1321 = vsel %vm1239, %v38, -inf
  %1322 = vmax.xlane.f32.xlu0 %v1321
  %v1323 = vpop.xlane.xlu0 %1322
  %v1324 = vsel %vm1239, %v39, -inf
  %1325 = vmax.xlane.f32.xlu0 %v1324
  %v1326 = vpop.xlane.xlu0 %1325
  %v1327 = vsel %vm1239, %v40, -inf
  %1328 = vmax.xlane.f32.xlu0 %v1327
  %v1329 = vpop.xlane.xlu0 %1328
  %v1330 = vsel %vm1239, %v41, -inf
  %1331 = vmax.xlane.f32.xlu0 %v1330
  %v1332 = vpop.xlane.xlu0 %1331
  %v1333 = vsel %vm1239, %v42, -inf
  %1334 = vmax.xlane.f32.xlu0 %v1333
  %v1335 = vpop.xlane.xlu0 %1334
  %v1336 = vsel %vm1239, %v43, -inf
  %1337 = vmax.xlane.f32.xlu0 %v1336
  %v1338 = vpop.xlane.xlu0 %1337
  %v1339 = vsel %vm1239, %v44, -inf
  %1340 = vmax.xlane.f32.xlu0 %v1339
  %v1341 = vpop.xlane.xlu0 %1340
  %v1342 = vsel %vm1239, %v45, -inf
  %1343 = vmax.xlane.f32.xlu0 %v1342
  %v1344 = vpop.xlane.xlu0 %1343
  %v1345 = vsel %vm1239, %v46, -inf
  %1346 = vmax.xlane.f32.xlu0 %v1345
  %v1347 = vpop.xlane.xlu0 %1346
  %v1348 = vsel %vm1239, %v47, -inf
  %1349 = vmax.xlane.f32.xlu0 %v1348
  %v1350 = vpop.xlane.xlu0 %1349
  %v1351 = vsel %vm1239, %v48, -inf
  %1352 = vmax.xlane.f32.xlu0 %v1351
  %v1353 = vpop.xlane.xlu0 %1352
  %v1354 = vsel %vm1239, %v49, -inf
  %1355 = vmax.xlane.f32.xlu0 %v1354
  %v1356 = vpop.xlane.xlu0 %1355
  %v1357 = vsel %vm1239, %v50, -inf
  %1358 = vmax.xlane.f32.xlu0 %v1357
  %v1359 = vpop.xlane.xlu0 %1358
  %v1360 = vsel %vm1239, %v51, -inf
  %1361 = vmax.xlane.f32.xlu0 %v1360
  %v1362 = vpop.xlane.xlu0 %1361
  %v1363 = vsel %vm1239, %v52, -inf
  %1364 = vmax.xlane.f32.xlu0 %v1363
  %v1365 = vpop.xlane.xlu0 %1364
  %v1366 = vsel %vm1239, %v53, -inf
  %1367 = vmax.xlane.f32.xlu0 %v1366
  %v1368 = vpop.xlane.xlu0 %1367
  %v1369 = vsel %vm1239, %v54, -inf
  %1370 = vmax.xlane.f32.xlu0 %v1369
  %v1371 = vpop.xlane.xlu0 %1370
  %v1372 = vsel %vm1239, %v55, -inf
  %1373 = vmax.xlane.f32.xlu0 %v1372
  %v1374 = vpop.xlane.xlu0 %1373
  %v1375 = vsel %vm1239, %v56, -inf
  %1376 = vmax.xlane.f32.xlu0 %v1375
  %v1377 = vpop.xlane.xlu0 %1376
  %v1378 = vsel %vm1239, %v57, -inf
  %1379 = vmax.xlane.f32.xlu0 %v1378
  %v1380 = vpop.xlane.xlu0 %1379
  %v1381 = vsel %vm1239, %v58, -inf
  %1382 = vmax.xlane.f32.xlu0 %v1381
  %v1383 = vpop.xlane.xlu0 %1382
  %v1384 = vsel %vm1239, %v59, -inf
  %1385 = vmax.xlane.f32.xlu0 %v1384
  %v1386 = vpop.xlane.xlu0 %1385
  %v1387 = vsel %vm1239, %v60, -inf
  %1388 = vmax.xlane.f32.xlu0 %v1387
  %v1389 = vpop.xlane.xlu0 %1388
  %v1390 = vsel %vm1239, %v61, -inf
  %1391 = vmax.xlane.f32.xlu0 %v1390
  %v1392 = vpop.xlane.xlu0 %1391
  %v1393 = vsel %vm1239, %v62, -inf
  %1394 = vmax.xlane.f32.xlu0 %v1393
  %v1395 = vpop.xlane.xlu0 %1394
  %v1396 = vsel %vm1239, %v63, -inf
  %1397 = vmax.xlane.f32.xlu0 %v1396
  %v1398 = vpop.xlane.xlu0 %1397
  %v1399 = vsel %vm1239, %v64, -inf
  %1400 = vmax.xlane.f32.xlu0 %v1399
  %v1401 = vpop.xlane.xlu0 %1400
  %v1402 = vsel %vm1239, %v65, -inf
  %1403 = vmax.xlane.f32.xlu0 %v1402
  %v1404 = vpop.xlane.xlu0 %1403
  %v1405 = vsel %vm1239, %v66, -inf
  %1406 = vmax.xlane.f32.xlu0 %v1405
  %v1407 = vpop.xlane.xlu0 %1406
  %v1408 = vsel %vm1239, %v67, -inf
  %1409 = vmax.xlane.f32.xlu0 %v1408
  %v1410 = vpop.xlane.xlu0 %1409
  %v1411 = vsel %vm1239, %v68, -inf
  %1412 = vmax.xlane.f32.xlu0 %v1411
  %v1413 = vpop.xlane.xlu0 %1412
  %v1414 = vsel %vm1239, %v69, -inf
  %1415 = vmax.xlane.f32.xlu0 %v1414
  %v1416 = vpop.xlane.xlu0 %1415
  %v1417 = vsel %vm1239, %v70, -inf
  %1418 = vmax.xlane.f32.xlu0 %v1417
  %v1419 = vpop.xlane.xlu0 %1418
  %v1420 = vsel %vm1239, %v71, -inf
  %1421 = vmax.xlane.f32.xlu0 %v1420
  %v1422 = vpop.xlane.xlu0 %1421
  %v1423 = vsel %vm1239, %v72, -inf
  %1424 = vmax.xlane.f32.xlu0 %v1423
  %v1425 = vpop.xlane.xlu0 %1424
  %v1426 = vsel %vm1239, %v73, -inf
  %1427 = vmax.xlane.f32.xlu0 %v1426
  %v1428 = vpop.xlane.xlu0 %1427
  %v1429 = vsel %vm1239, %v74, -inf
  %1430 = vmax.xlane.f32.xlu0 %v1429
  %v1431 = vpop.xlane.xlu0 %1430
  %1496 = vrot.lane.b32.xlu0 %v342, 4
  %v1497 = vpop.permute.xlu0 %1496
  %1498 = vrot.lane.b32.xlu0 %v347, 4
  %v1499 = vpop.permute.xlu0 %1498
  %1500 = vrot.lane.b32.xlu0 %v352, 4
  %v1501 = vpop.permute.xlu0 %1500
  %1502 = vrot.lane.b32.xlu0 %v357, 4
  %v1503 = vpop.permute.xlu0 %1502
  %1504 = vrot.lane.b32.xlu0 %v362, 4
  %v1505 = vpop.permute.xlu0 %1504
  %1506 = vrot.lane.b32.xlu0 %v367, 4
  %v1507 = vpop.permute.xlu0 %1506
  %1508 = vrot.lane.b32.xlu0 %v372, 4
  %v1509 = vpop.permute.xlu0 %1508
  %1510 = vrot.lane.b32.xlu0 %v377, 4
  %v1511 = vpop.permute.xlu0 %1510
  %1512 = vrot.lane.b32.xlu0 %v382, 4
  %v1513 = vpop.permute.xlu0 %1512
  %1514 = vrot.lane.b32.xlu0 %v387, 4
  %v1515 = vpop.permute.xlu0 %1514
  %1516 = vrot.lane.b32.xlu0 %v392, 4
  %v1517 = vpop.permute.xlu0 %1516
  %1518 = vrot.lane.b32.xlu0 %v397, 4
  %v1519 = vpop.permute.xlu0 %1518
  %1520 = vrot.lane.b32.xlu0 %v402, 4
  %v1521 = vpop.permute.xlu0 %1520
  %1522 = vrot.lane.b32.xlu0 %v407, 4
  %v1523 = vpop.permute.xlu0 %1522
  %1524 = vrot.lane.b32.xlu0 %v412, 4
  %v1525 = vpop.permute.xlu0 %1524
  %1526 = vrot.lane.b32.xlu0 %v417, 4
  %v1527 = vpop.permute.xlu0 %1526
  %1528 = vrot.lane.b32.xlu0 %v422, 4
  %v1529 = vpop.permute.xlu0 %1528
  %1530 = vrot.lane.b32.xlu0 %v427, 4
  %v1531 = vpop.permute.xlu0 %1530
  %1532 = vrot.lane.b32.xlu0 %v432, 4
  %v1533 = vpop.permute.xlu0 %1532
  %1534 = vrot.lane.b32.xlu0 %v437, 4
  %v1535 = vpop.permute.xlu0 %1534
  %1536 = vrot.lane.b32.xlu0 %v442, 4
  %v1537 = vpop.permute.xlu0 %1536
  %1538 = vrot.lane.b32.xlu0 %v447, 4
  %v1539 = vpop.permute.xlu0 %1538
  %1540 = vrot.lane.b32.xlu0 %v452, 4
  %v1541 = vpop.permute.xlu0 %1540
  %1542 = vrot.lane.b32.xlu0 %v457, 4
  %v1543 = vpop.permute.xlu0 %1542
  %1544 = vrot.lane.b32.xlu0 %v462, 4
  %v1545 = vpop.permute.xlu0 %1544
  %1546 = vrot.lane.b32.xlu0 %v467, 4
  %v1547 = vpop.permute.xlu0 %1546
  %1548 = vrot.lane.b32.xlu0 %v472, 4
  %v1549 = vpop.permute.xlu0 %1548
  %1550 = vrot.lane.b32.xlu0 %v477, 4
  %v1551 = vpop.permute.xlu0 %1550
  %1552 = vrot.lane.b32.xlu0 %v482, 4
  %v1553 = vpop.permute.xlu0 %1552
  %1554 = vrot.lane.b32.xlu0 %v487, 4
  %v1555 = vpop.permute.xlu0 %1554
  %1556 = vrot.lane.b32.xlu0 %v492, 4
  %v1557 = vpop.permute.xlu0 %1556
  %1558 = vrot.lane.b32.xlu0 %v497, 4
  %v1559 = vpop.permute.xlu0 %1558
  %1560 = vrot.lane.b32.xlu0 %v502, 4
  %v1561 = vpop.permute.xlu0 %1560
  %1562 = vrot.lane.b32.xlu0 %v507, 4
  %v1563 = vpop.permute.xlu0 %1562
  %1564 = vrot.lane.b32.xlu0 %v512, 4
  %v1565 = vpop.permute.xlu0 %1564
  %1566 = vrot.lane.b32.xlu0 %v517, 4
  %v1567 = vpop.permute.xlu0 %1566
  %1568 = vrot.lane.b32.xlu0 %v522, 4
  %v1569 = vpop.permute.xlu0 %1568
  %1570 = vrot.lane.b32.xlu0 %v527, 4
  %v1571 = vpop.permute.xlu0 %1570
  %1572 = vrot.lane.b32.xlu0 %v532, 4
  %v1573 = vpop.permute.xlu0 %1572
  %1574 = vrot.lane.b32.xlu0 %v537, 4
  %v1575 = vpop.permute.xlu0 %1574
  %1576 = vrot.lane.b32.xlu0 %v542, 4
  %v1577 = vpop.permute.xlu0 %1576
  %1578 = vrot.lane.b32.xlu0 %v547, 4
  %v1579 = vpop.permute.xlu0 %1578
  %1580 = vrot.lane.b32.xlu0 %v552, 4
  %v1581 = vpop.permute.xlu0 %1580
  %1582 = vrot.lane.b32.xlu0 %v557, 4
  %v1583 = vpop.permute.xlu0 %1582
  %1584 = vrot.lane.b32.xlu0 %v562, 4
  %v1585 = vpop.permute.xlu0 %1584
  %1586 = vrot.lane.b32.xlu0 %v567, 4
  %v1587 = vpop.permute.xlu0 %1586
  %1588 = vrot.lane.b32.xlu0 %v572, 4
  %v1589 = vpop.permute.xlu0 %1588
  %1590 = vrot.lane.b32.xlu0 %v577, 4
  %v1591 = vpop.permute.xlu0 %1590
  %1592 = vrot.lane.b32.xlu0 %v582, 4
  %v1593 = vpop.permute.xlu0 %1592
  %1594 = vrot.lane.b32.xlu0 %v587, 4
  %v1595 = vpop.permute.xlu0 %1594
  %1596 = vrot.lane.b32.xlu0 %v592, 4
  %v1597 = vpop.permute.xlu0 %1596
  %1598 = vrot.lane.b32.xlu0 %v597, 4
  %v1599 = vpop.permute.xlu0 %1598
  %1600 = vrot.lane.b32.xlu0 %v602, 4
  %v1601 = vpop.permute.xlu0 %1600
  %1602 = vrot.lane.b32.xlu0 %v607, 4
  %v1603 = vpop.permute.xlu0 %1602
  %1604 = vrot.lane.b32.xlu0 %v612, 4
  %v1605 = vpop.permute.xlu0 %1604
  %1606 = vrot.lane.b32.xlu0 %v617, 4
  %v1607 = vpop.permute.xlu0 %1606
  %1608 = vrot.lane.b32.xlu0 %v622, 4
  %v1609 = vpop.permute.xlu0 %1608
  %1610 = vrot.lane.b32.xlu0 %v627, 4
  %v1611 = vpop.permute.xlu0 %1610
  %1612 = vrot.lane.b32.xlu0 %v632, 4
  %v1613 = vpop.permute.xlu0 %1612
  %1614 = vrot.lane.b32.xlu0 %v637, 4
  %v1615 = vpop.permute.xlu0 %1614
  %1616 = vrot.lane.b32.xlu0 %v642, 4
  %v1617 = vpop.permute.xlu0 %1616
  %1618 = vrot.lane.b32.xlu0 %v647, 4
  %v1619 = vpop.permute.xlu0 %1618
  %1620 = vrot.lane.b32.xlu0 %v652, 4
  %v1621 = vpop.permute.xlu0 %1620
  %1622 = vrot.lane.b32.xlu0 %v657, 4
  %v1623 = vpop.permute.xlu0 %1622
  %vm1688 = vcmask 7168
  %v1689 = vsel %vm1688, %v663, %v856
  %v1690 = vsel %vm1688, %v666, %v859
  %v1691 = vsel %vm1688, %v669, %v862
  %v1692 = vsel %vm1688, %v672, %v865
  %v1693 = vsel %vm1688, %v675, %v868
  %v1694 = vsel %vm1688, %v678, %v871
  %v1695 = vsel %vm1688, %v681, %v874
  %v1696 = vsel %vm1688, %v684, %v877
  %v1697 = vsel %vm1688, %v687, %v880
  %v1698 = vsel %vm1688, %v690, %v883
  %v1699 = vsel %vm1688, %v693, %v886
  %v1700 = vsel %vm1688, %v696, %v889
  %v1701 = vsel %vm1688, %v699, %v892
  %v1702 = vsel %vm1688, %v702, %v895
  %v1703 = vsel %vm1688, %v705, %v898
  %v1704 = vsel %vm1688, %v708, %v901
  %v1705 = vsel %vm1688, %v711, %v904
  %v1706 = vsel %vm1688, %v714, %v907
  %v1707 = vsel %vm1688, %v717, %v910
  %v1708 = vsel %vm1688, %v720, %v913
  %v1709 = vsel %vm1688, %v723, %v916
  %v1710 = vsel %vm1688, %v726, %v919
  %v1711 = vsel %vm1688, %v729, %v922
  %v1712 = vsel %vm1688, %v732, %v925
  %v1713 = vsel %vm1688, %v735, %v928
  %v1714 = vsel %vm1688, %v738, %v931
  %v1715 = vsel %vm1688, %v741, %v934
  %v1716 = vsel %vm1688, %v744, %v937
  %v1717 = vsel %vm1688, %v747, %v940
  %v1718 = vsel %vm1688, %v750, %v943
  %v1719 = vsel %vm1688, %v753, %v946
  %v1720 = vsel %vm1688, %v756, %v949
  %v1721 = vsel %vm1688, %v759, %v952
  %v1722 = vsel %vm1688, %v762, %v955
  %v1723 = vsel %vm1688, %v765, %v958
  %v1724 = vsel %vm1688, %v768, %v961
  %v1725 = vsel %vm1688, %v771, %v964
  %v1726 = vsel %vm1688, %v774, %v967
  %v1727 = vsel %vm1688, %v777, %v970
  %v1728 = vsel %vm1688, %v780, %v973
  %v1729 = vsel %vm1688, %v783, %v976
  %v1730 = vsel %vm1688, %v786, %v979
  %v1731 = vsel %vm1688, %v789, %v982
  %v1732 = vsel %vm1688, %v792, %v985
  %v1733 = vsel %vm1688, %v795, %v988
  %v1734 = vsel %vm1688, %v798, %v991
  %v1735 = vsel %vm1688, %v801, %v994
  %v1736 = vsel %vm1688, %v804, %v997
  %v1737 = vsel %vm1688, %v807, %v1000
  %v1738 = vsel %vm1688, %v810, %v1003
  %v1739 = vsel %vm1688, %v813, %v1006
  %v1740 = vsel %vm1688, %v816, %v1009
  %v1741 = vsel %vm1688, %v819, %v1012
  %v1742 = vsel %vm1688, %v822, %v1015
  %v1743 = vsel %vm1688, %v825, %v1018
  %v1744 = vsel %vm1688, %v828, %v1021
  %v1745 = vsel %vm1688, %v831, %v1024
  %v1746 = vsel %vm1688, %v834, %v1027
  %v1747 = vsel %vm1688, %v837, %v1030
  %v1748 = vsel %vm1688, %v840, %v1033
  %v1749 = vsel %vm1688, %v843, %v1036
  %v1750 = vsel %vm1688, %v846, %v1039
  %v1751 = vsel %vm1688, %v849, %v1042
  %v1752 = vsel %vm1688, %v852, %v1045
  %vm1753 = vcmask 15360
  %v1754 = vsel %vm1753, %v1689, %v1049
  %v1755 = vsel %vm1753, %v1690, %v1052
  %v1756 = vsel %vm1753, %v1691, %v1055
  %v1757 = vsel %vm1753, %v1692, %v1058
  %v1758 = vsel %vm1753, %v1693, %v1061
  %v1759 = vsel %vm1753, %v1694, %v1064
  %v1760 = vsel %vm1753, %v1695, %v1067
  %v1761 = vsel %vm1753, %v1696, %v1070
  %v1762 = vsel %vm1753, %v1697, %v1073
  %v1763 = vsel %vm1753, %v1698, %v1076
  %v1764 = vsel %vm1753, %v1699, %v1079
  %v1765 = vsel %vm1753, %v1700, %v1082
  %v1766 = vsel %vm1753, %v1701, %v1085
  %v1767 = vsel %vm1753, %v1702, %v1088
  %v1768 = vsel %vm1753, %v1703, %v1091
  %v1769 = vsel %vm1753, %v1704, %v1094
  %v1770 = vsel %vm1753, %v1705, %v1097
  %v1771 = vsel %vm1753, %v1706, %v1100
  %v1772 = vsel %vm1753, %v1707, %v1103
  %v1773 = vsel %vm1753, %v1708, %v1106
  %v1774 = vsel %vm1753, %v1709, %v1109
  %v1775 = vsel %vm1753, %v1710, %v1112
  %v1776 = vsel %vm1753, %v1711, %v1115
  %v1777 = vsel %vm1753, %v1712, %v1118
  %v1778 = vsel %vm1753, %v1713, %v1121
  %v1779 = vsel %vm1753, %v1714, %v1124
  %v1780 = vsel %vm1753, %v1715, %v1127
  %v1781 = vsel %vm1753, %v1716, %v1130
  %v1782 = vsel %vm1753, %v1717, %v1133
  %v1783 = vsel %vm1753, %v1718, %v1136
  %v1784 = vsel %vm1753, %v1719, %v1139
  %v1785 = vsel %vm1753, %v1720, %v1142
  %v1786 = vsel %vm1753, %v1721, %v1145
  %v1787 = vsel %vm1753, %v1722, %v1148
  %v1788 = vsel %vm1753, %v1723, %v1151
  %v1789 = vsel %vm1753, %v1724, %v1154
  %v1790 = vsel %vm1753, %v1725, %v1157
  %v1791 = vsel %vm1753, %v1726, %v1160
  %v1792 = vsel %vm1753, %v1727, %v1163
  %v1793 = vsel %vm1753, %v1728, %v1166
  %v1794 = vsel %vm1753, %v1729, %v1169
  %v1795 = vsel %vm1753, %v1730, %v1172
  %v1796 = vsel %vm1753, %v1731, %v1175
  %v1797 = vsel %vm1753, %v1732, %v1178
  %v1798 = vsel %vm1753, %v1733, %v1181
  %v1799 = vsel %vm1753, %v1734, %v1184
  %v1800 = vsel %vm1753, %v1735, %v1187
  %v1801 = vsel %vm1753, %v1736, %v1190
  %v1802 = vsel %vm1753, %v1737, %v1193
  %v1803 = vsel %vm1753, %v1738, %v1196
  %v1804 = vsel %vm1753, %v1739, %v1199
  %v1805 = vsel %vm1753, %v1740, %v1202
  %v1806 = vsel %vm1753, %v1741, %v1205
  %v1807 = vsel %vm1753, %v1742, %v1208
  %v1808 = vsel %vm1753, %v1743, %v1211
  %v1809 = vsel %vm1753, %v1744, %v1214
  %v1810 = vsel %vm1753, %v1745, %v1217
  %v1811 = vsel %vm1753, %v1746, %v1220
  %v1812 = vsel %vm1753, %v1747, %v1223
  %v1813 = vsel %vm1753, %v1748, %v1226
  %v1814 = vsel %vm1753, %v1749, %v1229
  %v1815 = vsel %vm1753, %v1750, %v1232
  %v1816 = vsel %vm1753, %v1751, %v1235
  %v1817 = vsel %vm1753, %v1752, %v1238
  %vm1818 = vcmask 23552
  %v1819 = vsel %vm1818, %v1754, %v1242
  %v1820 = vsel %vm1818, %v1755, %v1245
  %v1821 = vsel %vm1818, %v1756, %v1248
  %v1822 = vsel %vm1818, %v1757, %v1251
  %v1823 = vsel %vm1818, %v1758, %v1254
  %v1824 = vsel %vm1818, %v1759, %v1257
  %v1825 = vsel %vm1818, %v1760, %v1260
  %v1826 = vsel %vm1818, %v1761, %v1263
  %v1827 = vsel %vm1818, %v1762, %v1266
  %v1828 = vsel %vm1818, %v1763, %v1269
  %v1829 = vsel %vm1818, %v1764, %v1272
  %v1830 = vsel %vm1818, %v1765, %v1275
  %v1831 = vsel %vm1818, %v1766, %v1278
  %v1832 = vsel %vm1818, %v1767, %v1281
  %v1833 = vsel %vm1818, %v1768, %v1284
  %v1834 = vsel %vm1818, %v1769, %v1287
  %v1835 = vsel %vm1818, %v1770, %v1290
  %v1836 = vsel %vm1818, %v1771, %v1293
  %v1837 = vsel %vm1818, %v1772, %v1296
  %v1838 = vsel %vm1818, %v1773, %v1299
  %v1839 = vsel %vm1818, %v1774, %v1302
  %v1840 = vsel %vm1818, %v1775, %v1305
  %v1841 = vsel %vm1818, %v1776, %v1308
  %v1842 = vsel %vm1818, %v1777, %v1311
  %v1843 = vsel %vm1818, %v1778, %v1314
  %v1844 = vsel %vm1818, %v1779, %v1317
  %v1845 = vsel %vm1818, %v1780, %v1320
  %v1846 = vsel %vm1818, %v1781, %v1323
  %v1847 = vsel %vm1818, %v1782, %v1326
  %v1848 = vsel %vm1818, %v1783, %v1329
  %v1849 = vsel %vm1818, %v1784, %v1332
  %v1850 = vsel %vm1818, %v1785, %v1335
  %v1851 = vsel %vm1818, %v1786, %v1338
  %v1852 = vsel %vm1818, %v1787, %v1341
  %v1853 = vsel %vm1818, %v1788, %v1344
  %v1854 = vsel %vm1818, %v1789, %v1347
  %v1855 = vsel %vm1818, %v1790, %v1350
  %v1856 = vsel %vm1818, %v1791, %v1353
  %v1857 = vsel %vm1818, %v1792, %v1356
  %v1858 = vsel %vm1818, %v1793, %v1359
  %v1859 = vsel %vm1818, %v1794, %v1362
  %v1860 = vsel %vm1818, %v1795, %v1365
  %v1861 = vsel %vm1818, %v1796, %v1368
  %v1862 = vsel %vm1818, %v1797, %v1371
  %v1863 = vsel %vm1818, %v1798, %v1374
  %v1864 = vsel %vm1818, %v1799, %v1377
  %v1865 = vsel %vm1818, %v1800, %v1380
  %v1866 = vsel %vm1818, %v1801, %v1383
  %v1867 = vsel %vm1818, %v1802, %v1386
  %v1868 = vsel %vm1818, %v1803, %v1389
  %v1869 = vsel %vm1818, %v1804, %v1392
  %v1870 = vsel %vm1818, %v1805, %v1395
  %v1871 = vsel %vm1818, %v1806, %v1398
  %v1872 = vsel %vm1818, %v1807, %v1401
  %v1873 = vsel %vm1818, %v1808, %v1404
  %v1874 = vsel %vm1818, %v1809, %v1407
  %v1875 = vsel %vm1818, %v1810, %v1410
  %v1876 = vsel %vm1818, %v1811, %v1413
  %v1877 = vsel %vm1818, %v1812, %v1416
  %v1878 = vsel %vm1818, %v1813, %v1419
  %v1879 = vsel %vm1818, %v1814, %v1422
  %v1880 = vsel %vm1818, %v1815, %v1425
  %v1881 = vsel %vm1818, %v1816, %v1428
  %v1882 = vsel %vm1818, %v1817, %v1431
  %vm1883 = vcmask 31744
  %v1884 = vsel %vm1883, %v1819, %v1497
  %v1885 = vsel %vm1883, %v1820, %v1499
  %v1886 = vsel %vm1883, %v1821, %v1501
  %v1887 = vsel %vm1883, %v1822, %v1503
  %v1888 = vsel %vm1883, %v1823, %v1505
  %v1889 = vsel %vm1883, %v1824, %v1507
  %v1890 = vsel %vm1883, %v1825, %v1509
  %v1891 = vsel %vm1883, %v1826, %v1511
  %v1892 = vsel %vm1883, %v1827, %v1513
  %v1893 = vsel %vm1883, %v1828, %v1515
  %v1894 = vsel %vm1883, %v1829, %v1517
  %v1895 = vsel %vm1883, %v1830, %v1519
  %v1896 = vsel %vm1883, %v1831, %v1521
  %v1897 = vsel %vm1883, %v1832, %v1523
  %v1898 = vsel %vm1883, %v1833, %v1525
  %v1899 = vsel %vm1883, %v1834, %v1527
  %v1900 = vsel %vm1883, %v1835, %v1529
  %v1901 = vsel %vm1883, %v1836, %v1531
  %v1902 = vsel %vm1883, %v1837, %v1533
  %v1903 = vsel %vm1883, %v1838, %v1535
  %v1904 = vsel %vm1883, %v1839, %v1537
  %v1905 = vsel %vm1883, %v1840, %v1539
  %v1906 = vsel %vm1883, %v1841, %v1541
  %v1907 = vsel %vm1883, %v1842, %v1543
  %v1908 = vsel %vm1883, %v1843, %v1545
  %v1909 = vsel %vm1883, %v1844, %v1547
  %v1910 = vsel %vm1883, %v1845, %v1549
  %v1911 = vsel %vm1883, %v1846, %v1551
  %v1912 = vsel %vm1883, %v1847, %v1553
  %v1913 = vsel %vm1883, %v1848, %v1555
  %v1914 = vsel %vm1883, %v1849, %v1557
  %v1915 = vsel %vm1883, %v1850, %v1559
  %v1916 = vsel %vm1883, %v1851, %v1561
  %v1917 = vsel %vm1883, %v1852, %v1563
  %v1918 = vsel %vm1883, %v1853, %v1565
  %v1919 = vsel %vm1883, %v1854, %v1567
  %v1920 = vsel %vm1883, %v1855, %v1569
  %v1921 = vsel %vm1883, %v1856, %v1571
  %v1922 = vsel %vm1883, %v1857, %v1573
  %v1923 = vsel %vm1883, %v1858, %v1575
  %v1924 = vsel %vm1883, %v1859, %v1577
  %v1925 = vsel %vm1883, %v1860, %v1579
  %v1926 = vsel %vm1883, %v1861, %v1581
  %v1927 = vsel %vm1883, %v1862, %v1583
  %v1928 = vsel %vm1883, %v1863, %v1585
  %v1929 = vsel %vm1883, %v1864, %v1587
  %v1930 = vsel %vm1883, %v1865, %v1589
  %v1931 = vsel %vm1883, %v1866, %v1591
  %v1932 = vsel %vm1883, %v1867, %v1593
  %v1933 = vsel %vm1883, %v1868, %v1595
  %v1934 = vsel %vm1883, %v1869, %v1597
  %v1935 = vsel %vm1883, %v1870, %v1599
  %v1936 = vsel %vm1883, %v1871, %v1601
  %v1937 = vsel %vm1883, %v1872, %v1603
  %v1938 = vsel %vm1883, %v1873, %v1605
  %v1939 = vsel %vm1883, %v1874, %v1607
  %v1940 = vsel %vm1883, %v1875, %v1609
  %v1941 = vsel %vm1883, %v1876, %v1611
  %v1942 = vsel %vm1883, %v1877, %v1613
  %v1943 = vsel %vm1883, %v1878, %v1615
  %v1944 = vsel %vm1883, %v1879, %v1617
  %v1945 = vsel %vm1883, %v1880, %v1619
  %v1946 = vsel %vm1883, %v1881, %v1621
  %v1947 = vsel %vm1883, %v1882, %v1623
  %vm1948 = vcmask 64512
  %1949 = vst.msk [vmem:[%s2] sm:$0xff] %vm1948, %v1884
  %1950 = vst.msk [vmem:[%s2 + $0x8] sm:$0xff] %vm1948, %v1885
  %1951 = vst.msk [vmem:[%s2 + $0x10] sm:$0xff] %vm1948, %v1886
  %1952 = vst.msk [vmem:[%s2 + $0x18] sm:$0xff] %vm1948, %v1887
  %1953 = vst.msk [vmem:[%s2 + $0x20] sm:$0xff] %vm1948, %v1888
  %1954 = vst.msk [vmem:[%s2 + $0x28] sm:$0xff] %vm1948, %v1889
  %1955 = vst.msk [vmem:[%s2 + $0x30] sm:$0xff] %vm1948, %v1890
  %1956 = vst.msk [vmem:[%s2 + $0x38] sm:$0xff] %vm1948, %v1891
  %1957 = vst.msk [vmem:[%s2 + $0x40] sm:$0xff] %vm1948, %v1892
  %1958 = vst.msk [vmem:[%s2 + $0x48] sm:$0xff] %vm1948, %v1893
  %1959 = vst.msk [vmem:[%s2 + $0x50] sm:$0xff] %vm1948, %v1894
  %1960 = vst.msk [vmem:[%s2 + $0x58] sm:$0xff] %vm1948, %v1895
  %1961 = vst.msk [vmem:[%s2 + $0x60] sm:$0xff] %vm1948, %v1896
  %1962 = vst.msk [vmem:[%s2 + $0x68] sm:$0xff] %vm1948, %v1897
  %1963 = vst.msk [vmem:[%s2 + $0x70] sm:$0xff] %vm1948, %v1898
  %1964 = vst.msk [vmem:[%s2 + $0x78] sm:$0xff] %vm1948, %v1899
  %1965 = vst.msk [vmem:[%s2 + $0x80] sm:$0xff] %vm1948, %v1900
  %1966 = vst.msk [vmem:[%s2 + $0x88] sm:$0xff] %vm1948, %v1901
  %1967 = vst.msk [vmem:[%s2 + $0x90] sm:$0xff] %vm1948, %v1902
  %1968 = vst.msk [vmem:[%s2 + $0x98] sm:$0xff] %vm1948, %v1903
  %1969 = vst.msk [vmem:[%s2 + $0xa0] sm:$0xff] %vm1948, %v1904
  %1970 = vst.msk [vmem:[%s2 + $0xa8] sm:$0xff] %vm1948, %v1905
  %1971 = vst.msk [vmem:[%s2 + $0xb0] sm:$0xff] %vm1948, %v1906
  %1972 = vst.msk [vmem:[%s2 + $0xb8] sm:$0xff] %vm1948, %v1907
  %1973 = vst.msk [vmem:[%s2 + $0xc0] sm:$0xff] %vm1948, %v1908
  %1974 = vst.msk [vmem:[%s2 + $0xc8] sm:$0xff] %vm1948, %v1909
  %1975 = vst.msk [vmem:[%s2 + $0xd0] sm:$0xff] %vm1948, %v1910
  %1976 = vst.msk [vmem:[%s2 + $0xd8] sm:$0xff] %vm1948, %v1911
  %1977 = vst.msk [vmem:[%s2 + $0xe0] sm:$0xff] %vm1948, %v1912
  %1978 = vst.msk [vmem:[%s2 + $0xe8] sm:$0xff] %vm1948, %v1913
  %1979 = vst.msk [vmem:[%s2 + $0xf0] sm:$0xff] %vm1948, %v1914
  %1980 = vst.msk [vmem:[%s2 + $0xf8] sm:$0xff] %vm1948, %v1915
  %1981 = vst.msk [vmem:[%s2 + $0x100] sm:$0xff] %vm1948, %v1916
  %1982 = vst.msk [vmem:[%s2 + $0x108] sm:$0xff] %vm1948, %v1917
  %1983 = vst.msk [vmem:[%s2 + $0x110] sm:$0xff] %vm1948, %v1918
  %1984 = vst.msk [vmem:[%s2 + $0x118] sm:$0xff] %vm1948, %v1919
  %1985 = vst.msk [vmem:[%s2 + $0x120] sm:$0xff] %vm1948, %v1920
  %1986 = vst.msk [vmem:[%s2 + $0x128] sm:$0xff] %vm1948, %v1921
  %1987 = vst.msk [vmem:[%s2 + $0x130] sm:$0xff] %vm1948, %v1922
  %1988 = vst.msk [vmem:[%s2 + $0x138] sm:$0xff] %vm1948, %v1923
  %1989 = vst.msk [vmem:[%s2 + $0x140] sm:$0xff] %vm1948, %v1924
  %1990 = vst.msk [vmem:[%s2 + $0x148] sm:$0xff] %vm1948, %v1925
  %1991 = vst.msk [vmem:[%s2 + $0x150] sm:$0xff] %vm1948, %v1926
  %1992 = vst.msk [vmem:[%s2 + $0x158] sm:$0xff] %vm1948, %v1927
  %1993 = vst.msk [vmem:[%s2 + $0x160] sm:$0xff] %vm1948, %v1928
  %1994 = vst.msk [vmem:[%s2 + $0x168] sm:$0xff] %vm1948, %v1929
  %1995 = vst.msk [vmem:[%s2 + $0x170] sm:$0xff] %vm1948, %v1930
  %1996 = vst.msk [vmem:[%s2 + $0x178] sm:$0xff] %vm1948, %v1931
  %1997 = vst.msk [vmem:[%s2 + $0x180] sm:$0xff] %vm1948, %v1932
  %1998 = vst.msk [vmem:[%s2 + $0x188] sm:$0xff] %vm1948, %v1933
  %1999 = vst.msk [vmem:[%s2 + $0x190] sm:$0xff] %vm1948, %v1934
  %2000 = vst.msk [vmem:[%s2 + $0x198] sm:$0xff] %vm1948, %v1935
  %2001 = vst.msk [vmem:[%s2 + $0x1a0] sm:$0xff] %vm1948, %v1936
  %2002 = vst.msk [vmem:[%s2 + $0x1a8] sm:$0xff] %vm1948, %v1937
  %2003 = vst.msk [vmem:[%s2 + $0x1b0] sm:$0xff] %vm1948, %v1938
  %2004 = vst.msk [vmem:[%s2 + $0x1b8] sm:$0xff] %vm1948, %v1939
  %2005 = vst.msk [vmem:[%s2 + $0x1c0] sm:$0xff] %vm1948, %v1940
  %2006 = vst.msk [vmem:[%s2 + $0x1c8] sm:$0xff] %vm1948, %v1941
  %2007 = vst.msk [vmem:[%s2 + $0x1d0] sm:$0xff] %vm1948, %v1942
  %2008 = vst.msk [vmem:[%s2 + $0x1d8] sm:$0xff] %vm1948, %v1943
  %2009 = vst.msk [vmem:[%s2 + $0x1e0] sm:$0xff] %vm1948, %v1944
  %2010 = vst.msk [vmem:[%s2 + $0x1e8] sm:$0xff] %vm1948, %v1945
  %2011 = vst.msk [vmem:[%s2 + $0x1f0] sm:$0xff] %vm1948, %v1946
  %2012 = vst.msk [vmem:[%s2 + $0x1f8] sm:$0xff] %vm1948, %v1947
  // Predicated region
  $region10: #{spatial_attention_forward.2} parent=0 // pred_check
    _
  $region11: #{spatial_attention_forward.2} parent=0 // pred_check_branch
    %2014 = sbr.rel (0) target = $region13
  $region12: #{spatial_attention_forward.2} parent=0 // pred_region
    _
  $region13: #{spatial_attention_forward.2} parent=0 // pred_fallthru
    _
  // Predicated region
  $region14: #{spatial_attention_forward.2} parent=0 // pred_check
    _
  $region15: #{spatial_attention_forward.2} parent=0 // pred_check_branch
    %2016 = sbr.rel (0) target = $region17
  $region16: #{spatial_attention_forward.2} parent=0 // pred_region
    _
  $region17: #{spatial_attention_forward.2} parent=0 // pred_fallthru
    _

// kernel: spatial_attention_forward.3
$region0: #{spatial_attention_forward.3}
  #allocation0 [shape = 'u32[]', space=smem, size = 0x4, offset = 0x4, fixed_abs, tag = 'smem constant byte address 0x4 - core index']
  #allocation1 [shape = 'u32[144,128]{1,0:T(1,128)}', space=vmem, size = 0x12000, scoped, tag = 'internal scratch']
  #allocation2 [shape = 'f32[1,1]{1,0:T(1,128)S(1)}', space=vmem, size = 0x200, scoped, tag = 'scoped memory for spatial_attention_forward.3']
  %s0 = inlined_call_operand.vmem [shape: f32[2,8,342], index: 0, kind: input, shape index: {}]
  %s1 = inlined_call_operand.vmem [shape: f32[8,72], index: 1, kind: input, shape index: {}]
  %s2 = inlined_call_operand.vmem [shape: f32[8,1], index: 2, kind: input, shape index: {}]
  %s3 = inlined_call_operand.vmem [shape: f32[8,72], index: 3, kind: input, shape index: {}]
  %s4 = inlined_call_operand.<no memory space> [shape: f32[1,1], index: 4, kind: input, shape index: {}]
  %s5 = inlined_call_operand.vmem [shape: f32[2,1,288], index: 5, kind: output, shape index: {}]
  %s6 = sld [smem:[#allocation0]]
  $region53: #{spatial_attention_forward.3} parent=0
    _
  %s8 = ssub.s32 1, %s6
  %s9 = scalar_select 0, %s8, %s6
  %v10 = vstv %s4
  %11 = vst [vmem:[#allocation2] sm:$0x1] %v10
  loop: start=0, step=1, limit=4
  $region2: #{spatial_attention_forward.3} parent=0 // loop_pre_header
    _
  $region3: #{spatial_attention_forward.3} parent=0 // loop_header
    %s13 = sphi 0, %s17
    %p14 = scmp.ge.s32.totalorder %s13, 4
    %s23 = sphi 0, %s25
    %s26 = sphi 0, %s23
    %s27 = sphi 0, %s26
    %s43 = sphi 0, %s27
    %s47 = sphi 0, %s47
    %s49 = sphi 0, %s47
    %s50 = sphi 0, %s49
    %s64 = sphi 0, %s50
    %s68 = sphi 0, %s68
    %s70 = sphi 0, %s68
    %s71 = sphi 0, %s70
    %s85 = sphi 0, %s71
    %s89 = sphi 0, %s89
    %s91 = sphi 0, %s89
    %s92 = sphi 0, %s91
    %s106 = sphi 0, %s92
    %s110 = sphi 0, %s110
    %s112 = sphi 0, %s110
    %s113 = sphi 0, %s112
    %s127 = sphi 0, %s113
    %s133 = sphi 0, %s135
    %s136 = sphi 0, %s133
    %s137 = sphi 0, %s136
    %s153 = sphi 0, %s137
  $region4: #{spatial_attention_forward.3} parent=0 // loop_header_branch
    %16 = sbr.rel (%p14) target = $region8
  $region5: #{spatial_attention_forward.3} parent=0 // loop_body
    %s18 = ssub.s32 %s13, 1
    %s19 = ssub.s32 %s13, 2
    %s20 = sadd.s32 %s13, 1
    %s21 = ssub.s32 %s13, %s20
    %p22 = scmp.eq.s32.totalorder %s21, 0
    %s24 = sadd.s32 %s23, 1
    %s25 = scalar_select %p22, %s23, %s24
    %p28 = pneg %p22
    %p29 = scmp.eq.s32.totalorder %s13, 1
    %p30 = por %p28, %p29
    %p31 = scmp.ne.s32.totalorder %s23, %s26
    %p32 = scmp.eq.s32.totalorder %s13, 0
    %p33 = por %p31, %p32
    %p34 = scmp.ne.s32.totalorder %s23, %s26
    %p35 = scmp.eq.s32.totalorder %s18, 1
    %p36 = por %p34, %p35
    %p37 = scmp.ne.s32.totalorder %s26, %s27
    %p38 = scmp.eq.s32.totalorder %s18, 0
    %p39 = por %p37, %p38
    %p40 = scmp.ne.s32.totalorder %s26, %s27
    %p41 = scmp.eq.s32.totalorder %s19, 1
    %p42 = por %p40, %p41
    %p44 = scmp.ne.s32.totalorder %s27, %s43
    %p45 = scmp.eq.s32.totalorder %s19, 0
    %p46 = por %p44, %p45
    %s48 = sadd.s32 %s47, 1
    %p51 = scmp.eq.s32.totalorder %s13, 1
    %p52 = scmp.ne.s32.totalorder %s47, %s49
    %p53 = scmp.eq.s32.totalorder %s13, 0
    %p54 = por %p52, %p53
    %p55 = scmp.ne.s32.totalorder %s47, %s49
    %p56 = scmp.eq.s32.totalorder %s18, 1
    %p57 = por %p55, %p56
    %p58 = scmp.ne.s32.totalorder %s49, %s50
    %p59 = scmp.eq.s32.totalorder %s18, 0
    %p60 = por %p58, %p59
    %p61 = scmp.ne.s32.totalorder %s49, %s50
    %p62 = scmp.eq.s32.totalorder %s19, 1
    %p63 = por %p61, %p62
    %p65 = scmp.ne.s32.totalorder %s50, %s64
    %p66 = scmp.eq.s32.totalorder %s19, 0
    %p67 = por %p65, %p66
    %s69 = sadd.s32 %s68, 1
    %p72 = scmp.eq.s32.totalorder %s13, 1
    %p73 = scmp.ne.s32.totalorder %s68, %s70
    %p74 = scmp.eq.s32.totalorder %s13, 0
    %p75 = por %p73, %p74
    %p76 = scmp.ne.s32.totalorder %s68, %s70
    %p77 = scmp.eq.s32.totalorder %s18, 1
    %p78 = por %p76, %p77
    %p79 = scmp.ne.s32.totalorder %s70, %s71
    %p80 = scmp.eq.s32.totalorder %s18, 0
    %p81 = por %p79, %p80
    %p82 = scmp.ne.s32.totalorder %s70, %s71
    %p83 = scmp.eq.s32.totalorder %s19, 1
    %p84 = por %p82, %p83
    %p86 = scmp.ne.s32.totalorder %s71, %s85
    %p87 = scmp.eq.s32.totalorder %s19, 0
    %p88 = por %p86, %p87
    %s90 = sadd.s32 %s89, 1
    %p93 = scmp.eq.s32.totalorder %s13, 1
    %p94 = scmp.ne.s32.totalorder %s89, %s91
    %p95 = scmp.eq.s32.totalorder %s13, 0
    %p96 = por %p94, %p95
    %p97 = scmp.ne.s32.totalorder %s89, %s91
    %p98 = scmp.eq.s32.totalorder %s18, 1
    %p99 = por %p97, %p98
    %p100 = scmp.ne.s32.totalorder %s91, %s92
    %p101 = scmp.eq.s32.totalorder %s18, 0
    %p102 = por %p100, %p101
    %p103 = scmp.ne.s32.totalorder %s91, %s92
    %p104 = scmp.eq.s32.totalorder %s19, 1
    %p105 = por %p103, %p104
    %p107 = scmp.ne.s32.totalorder %s92, %s106
    %p108 = scmp.eq.s32.totalorder %s19, 0
    %p109 = por %p107, %p108
    %s111 = sadd.s32 %s110, 1
    %p114 = scmp.eq.s32.totalorder %s13, 1
    %p115 = scmp.ne.s32.totalorder %s110, %s112
    %p116 = scmp.eq.s32.totalorder %s13, 0
    %p117 = por %p115, %p116
    %p118 = scmp.ne.s32.totalorder %s110, %s112
    %p119 = scmp.eq.s32.totalorder %s18, 1
    %p120 = por %p118, %p119
    %p121 = scmp.ne.s32.totalorder %s112, %s113
    %p122 = scmp.eq.s32.totalorder %s18, 0
    %p123 = por %p121, %p122
    %p124 = scmp.ne.s32.totalorder %s112, %s113
    %p125 = scmp.eq.s32.totalorder %s19, 1
    %p126 = por %p124, %p125
    %p128 = scmp.ne.s32.totalorder %s113, %s127
    %p129 = scmp.eq.s32.totalorder %s19, 0
    %p130 = por %p128, %p129
    %s131 = ssub.s32 %s13, %s20
    %p132 = scmp.eq.s32.totalorder %s131, 0
    %s134 = sadd.s32 %s133, 1
    %s135 = scalar_select %p132, %s133, %s134
    %p138 = pneg %p132
    %p139 = scmp.eq.s32.totalorder %s13, 1
    %p140 = por %p138, %p139
    %p141 = scmp.ne.s32.totalorder %s133, %s136
    %p142 = scmp.eq.s32.totalorder %s13, 0
    %p143 = por %p141, %p142
    %p144 = scmp.ne.s32.totalorder %s133, %s136
    %p145 = scmp.eq.s32.totalorder %s18, 1
    %p146 = por %p144, %p145
    %p147 = scmp.ne.s32.totalorder %s136, %s137
    %p148 = scmp.eq.s32.totalorder %s18, 0
    %p149 = por %p147, %p148
    %p150 = scmp.ne.s32.totalorder %s136, %s137
    %p151 = scmp.eq.s32.totalorder %s19, 1
    %p152 = por %p150, %p151
    %p154 = scmp.ne.s32.totalorder %s137, %s153
    %p155 = scmp.eq.s32.totalorder %s19, 0
    %p156 = por %p154, %p155
    %p157 = scmp.le.s32.totalorder 1, %s13
    %p158 = scmp.lt.s32.totalorder %s13, 3
    %p159 = pnand %p157, %p158
    %p160 = pneg %p159
    // Predicated region
    $region9: #{spatial_attention_forward.3} parent=5 // pred_check
      _
    $region10: #{spatial_attention_forward.3} parent=5 // pred_check_branch
      %162 = sbr.rel (%p159) target = $region12
    $region11: #{spatial_attention_forward.3} parent=5 // pred_region
      %s163 = ssub.s32 %s13, 1
      // Predicated region
      $region13: #{spatial_attention_forward.3} parent=11 // pred_check
        %p164 = pneg %p60
      $region14: #{spatial_attention_forward.3} parent=11 // pred_check_branch
        %166 = sbr.rel (%p164) target = $region16
      $region15: #{spatial_attention_forward.3} parent=11 // pred_region
        _
      $region16: #{spatial_attention_forward.3} parent=11 // pred_fallthru
        _
      // Predicated region
      $region17: #{spatial_attention_forward.3} parent=11 // pred_check
        %p167 = pneg %p81
      $region18: #{spatial_attention_forward.3} parent=11 // pred_check_branch
        %169 = sbr.rel (%p167) target = $region20
      $region19: #{spatial_attention_forward.3} parent=11 // pred_region
        _
      $region20: #{spatial_attention_forward.3} parent=11 // pred_fallthru
        _
      // Predicated region
      $region21: #{spatial_attention_forward.3} parent=11 // pred_check
        %p170 = pneg %p102
      $region22: #{spatial_attention_forward.3} parent=11 // pred_check_branch
        %172 = sbr.rel (%p170) target = $region24
      $region23: #{spatial_attention_forward.3} parent=11 // pred_region
        _
      $region24: #{spatial_attention_forward.3} parent=11 // pred_fallthru
        _
      // Predicated region
      $region25: #{spatial_attention_forward.3} parent=11 // pred_check
        %p173 = pneg %p123
      $region26: #{spatial_attention_forward.3} parent=11 // pred_check_branch
        %175 = sbr.rel (%p173) target = $region28
      $region27: #{spatial_attention_forward.3} parent=11 // pred_region
        _
      $region28: #{spatial_attention_forward.3} parent=11 // pred_fallthru
        _
    $region12: #{spatial_attention_forward.3} parent=5 // pred_fallthru
      _
    %p176 = scmp.lt.s32.totalorder %s13, 2
    // Predicated region
    $region29: #{spatial_attention_forward.3} parent=5 // pred_check
      %p177 = pneg %p176
    $region30: #{spatial_attention_forward.3} parent=5 // pred_check_branch
      %179 = sbr.rel (%p177) target = $region32
    $region31: #{spatial_attention_forward.3} parent=5 // pred_region
      // Predicated region
      $region33: #{spatial_attention_forward.3} parent=31 // pred_check
        %p180 = pneg %p33
      $region34: #{spatial_attention_forward.3} parent=31 // pred_check_branch
        %182 = sbr.rel (%p180) target = $region36
      $region35: #{spatial_attention_forward.3} parent=31 // pred_region
        %p183 = scmp.lt.s32.totalorder %s13, 1
        %s184 = scalar_select %p183, %s13, 1
        %s185 = smul.addr %s184, 3
        %s186 = smul.addr %s185, 8
        %s187 = scalar_lea.vmem %s0, %s186
      $region36: #{spatial_attention_forward.3} parent=31 // pred_fallthru
        _
    $region32: #{spatial_attention_forward.3} parent=5 // pred_fallthru
      _
    %p188 = scmp.le.s32.totalorder 1, %s13
    %p189 = scmp.lt.s32.totalorder %s13, 3
    %p190 = pnand %p188, %p189
    %p191 = pneg %p190
    // Predicated region
    $region37: #{spatial_attention_forward.3} parent=5 // pred_check
      _
    $region38: #{spatial_attention_forward.3} parent=5 // pred_check_branch
      %193 = sbr.rel (%p190) target = $region40
    $region39: #{spatial_attention_forward.3} parent=5 // pred_region
      %s194 = ssub.s32 %s13, 1
      %p195 = scmp.lt.s32.totalorder %s18, 1
      %s196 = scalar_select %p195, %s18, 1
      %s197 = smul.addr %s196, 3
      %s198 = smul.addr %s197, 8
      %s199 = scalar_lea.vmem %s0, %s198
      %p200 = pneg %p39
      %p201 = pneg %p36
      %p202 = pneg %p60
      %p203 = pneg %p57
      %p204 = pneg %p81
      %p205 = pneg %p78
      %p206 = pneg %p102
      %p207 = pneg %p99
      %p208 = pneg %p123
      %p209 = pneg %p120
      %p210 = pneg %p149
      %p211 = pneg %p146
      %p212 = scmp.lt.s32.totalorder %s18, 1
      %s213 = scalar_select %p212, %s18, 1
      %s214 = smul.addr %s213, 3
      %s215 = scalar_lea.vmem %s5, %s214
      %p216 = scmp.lt.s32.totalorder %s18, 1
      %s217 = scalar_select %p216, %s18, 1
      %s218 = smul.addr %s217, 3
      %s219 = smul.addr %s218, 8
      %s220 = scalar_lea.vmem %s0, %s219
      %p221 = scmp.lt.s32.totalorder %s18, 1
      %s222 = scalar_select %p221, %s18, 1
      %s223 = smul.addr %s222, 3
      %s224 = scalar_lea.vmem %s5, %s223
      %v225 = vld [vmem:[%s220] sm:$0xff]
      %v226 = vld [vmem:[%s220 + $0x8] sm:$0xff]
      %v227 = vld [vmem:[%s220 + $0x10] sm:$0xff]
      %231 = vrot.lane.b32.xlu0 %v225, 127
      %v232 = vpop.permute.xlu0 %231
      %233 = vrot.lane.b32.xlu0 %v226, 127
      %v234 = vpop.permute.xlu0 %233
      %235 = vrot.lane.b32.xlu0 %v227, 127
      %v236 = vpop.permute.xlu0 %235
      %vm237 = vcmask 1039360
      %v238 = vsel %vm237, %v232, %v234
      %v239 = vsel %vm237, %v234, %v236
      %243 = vrot.lane.b32.xlu0 %v225, 126
      %v244 = vpop.permute.xlu0 %243
      %245 = vrot.lane.b32.xlu0 %v226, 126
      %v246 = vpop.permute.xlu0 %245
      %247 = vrot.lane.b32.xlu0 %v227, 126
      %v248 = vpop.permute.xlu0 %247
      %vm249 = vcmask 1031168
      %v250 = vsel %vm249, %v244, %v246
      %v251 = vsel %vm249, %v246, %v248
      %255 = vrot.lane.b32.xlu0 %v225, 110
      %v256 = vpop.permute.xlu0 %255
      %257 = vrot.lane.b32.xlu0 %v226, 110
      %v258 = vpop.permute.xlu0 %257
      %259 = vrot.lane.b32.xlu0 %v227, 110
      %v260 = vpop.permute.xlu0 %259
      %vm261 = vcmask 900096
      %v262 = vsel %vm261, %v256, %v258
      %v263 = vsel %vm261, %v258, %v260
      %267 = vrot.lane.b32.xlu0 %v225, 109
      %v268 = vpop.permute.xlu0 %267
      %269 = vrot.lane.b32.xlu0 %v226, 109
      %v270 = vpop.permute.xlu0 %269
      %271 = vrot.lane.b32.xlu0 %v227, 109
      %v272 = vpop.permute.xlu0 %271
      %vm273 = vcmask 891904
      %v274 = vsel %vm273, %v268, %v270
      %v275 = vsel %vm273, %v270, %v272
      %279 = vrot.lane.b32.xlu0 %v225, 108
      %v280 = vpop.permute.xlu0 %279
      %281 = vrot.lane.b32.xlu0 %v226, 108
      %v282 = vpop.permute.xlu0 %281
      %283 = vrot.lane.b32.xlu0 %v227, 108
      %v284 = vpop.permute.xlu0 %283
      %vm285 = vcmask 883712
      %v286 = vsel %vm285, %v280, %v282
      %v287 = vsel %vm285, %v282, %v284
      %291 = vrot.lane.b32.xlu0 %v225, 92
      %v292 = vpop.permute.xlu0 %291
      %293 = vrot.lane.b32.xlu0 %v226, 92
      %v294 = vpop.permute.xlu0 %293
      %295 = vrot.lane.b32.xlu0 %v227, 92
      %v296 = vpop.permute.xlu0 %295
      %vm297 = vcmask 752640
      %v298 = vsel %vm297, %v292, %v294
      %v299 = vsel %vm297, %v294, %v296
      %303 = vrot.lane.b32.xlu0 %v225, 91
      %v304 = vpop.permute.xlu0 %303
      %305 = vrot.lane.b32.xlu0 %v226, 91
      %v306 = vpop.permute.xlu0 %305
      %307 = vrot.lane.b32.xlu0 %v227, 91
      %v308 = vpop.permute.xlu0 %307
      %vm309 = vcmask 744448
      %v310 = vsel %vm309, %v304, %v306
      %v311 = vsel %vm309, %v306, %v308
      %315 = vrot.lane.b32.xlu0 %v225, 90
      %v316 = vpop.permute.xlu0 %315
      %317 = vrot.lane.b32.xlu0 %v226, 90
      %v318 = vpop.permute.xlu0 %317
      %319 = vrot.lane.b32.xlu0 %v227, 90
      %v320 = vpop.permute.xlu0 %319
      %vm321 = vcmask 736256
      %v322 = vsel %vm321, %v316, %v318
      %v323 = vsel %vm321, %v318, %v320
      %v327 = vld [vmem:[%s1] sm:$0xff]
      %v328 = vld [vmem:[%s2] sm:$0xff]
      %330 = vset.pattern.permute.xlu0 0
      %331 = vperm.xlu0 %330, %v328
      %v332 = vpop.permute.xlu0 %331
      %vm334 = vcmask 588800
      %v336 = vsel %vm334, %v327, 0
      %338 = vmatprep.subr.mxu0 0.0
      %339 = vmatpush1.msra.mxu0 0.0
      %340 = vmatprep.subr.mxu0 0.0
      %341 = vmatpush1.msra.mxu0 0.0
      %342 = vmatprep.subr.mxu0 0.0
      %343 = vmatpush1.msra.mxu0 0.0
      %344 = vmatprep.subr.mxu0 0.0
      %345 = vmatpush1.msra.mxu0 0.0
      %346 = vmatprep.subr.mxu0 0.0
      %347 = vmatpush1.msra.mxu0 0.0
      %348 = vmatprep.subr.mxu0 0.0
      %349 = vmatpush1.msra.mxu0 0.0
      %350 = vmatprep.subr.mxu0 0.0
      %351 = vmatpush1.msra.mxu0 0.0
      %352 = vmatprep.subr.mxu0 %v323
      %353 = vmatpush1.msra.mxu0 %v322
      %354 = vmatprep.subr.mxu0 %v311
      %355 = vmatpush1.msra.mxu0 %v310
      %356 = vmatprep.subr.mxu0 %v299
      %357 = vmatpush1.msra.mxu0 %v298
      %358 = vmatprep.subr.mxu0 %v287
      %359 = vmatpush1.msra.mxu0 %v286
      %360 = vmatprep.subr.mxu0 %v275
      %361 = vmatpush1.msra.mxu0 %v274
      %362 = vmatprep.subr.mxu0 %v263
      %363 = vmatpush1.msra.mxu0 %v262
      %364 = vmatprep.subr.mxu0 %v251
      %365 = vmatpush1.msra.mxu0 %v250
      %366 = vmatprep.subr.mxu0 %v239
      %367 = vmatpush1.msra.mxu0 %v238
      %368 = vmatprep.subr.mxu0 %v226
      %369 = vmatpush1.msra.mxu0 %v225
      %370 = vmatprep.subr.mxu0 0.0
      %371 = vmatpush2.msra.mxu0 0.0
      %372 = vmatprep.subr.mxu0 0.0
      %373 = vmatpush2.msra.mxu0 0.0
      %374 = vmatprep.subr.mxu0 0.0
      %375 = vmatpush2.msra.mxu0 0.0
      %376 = vmatprep.subr.mxu0 0.0
      %377 = vmatpush2.msra.mxu0 0.0
      %378 = vmatprep.subr.mxu0 0.0
      %379 = vmatpush2.msra.mxu0 0.0
      %380 = vmatprep.subr.mxu0 0.0
      %381 = vmatpush2.msra.mxu0 0.0
      %382 = vmatprep.subr.mxu0 0.0
      %383 = vmatpush2.msra.mxu0 0.0
      %384 = vmatprep.subr.mxu0 0.0
      %385 = vmatpush2.msra.mxu0 0.0
      %386 = vmatprep.subr.mxu0 0.0
      %387 = vmatpush2.msra.mxu0 0.0
      %388 = vmatprep.subr.mxu0 0.0
      %389 = vmatpush2.msra.mxu0 0.0
      %390 = vmatprep.subr.mxu0 0.0
      %391 = vmatpush2.msra.mxu0 0.0
      %392 = vmatprep.subr.mxu0 0.0
      %393 = vmatpush2.msra.mxu0 0.0
      %394 = vmatprep.subr.mxu0 0.0
      %395 = vmatpush2.msra.mxu0 0.0
      %396 = vmatprep.subr.mxu0 0.0
      %397 = vmatpush2.msra.mxu0 0.0
      %398 = vmatprep.subr.mxu0 0.0
      %399 = vmatpush2.msra.mxu0 0.0
      %400 = vmatprep.subr.mxu0 0.0
      %401 = vmatpush2.msra.mxu0 0.0
      %402 = vmatprep.mubr.f32.mxu0 0.0
      %403 = vmatmul.mubr.f32.gmra.mxu0 %v336
      %v404 = vpop.f32.mrf.mxu0
      %v405 = vadd.f32 %v332, %v404
      %v406 = vpop.f32.mrf.mxu0
      %v407 = vadd.f32 %v332, %v406
      %408 = vdwg.mxu0
      %409 = vmatprep.subr.mxu0 0.0
      %410 = vmatpush1.msra.mxu0 0.0
      %411 = vmatprep.subr.mxu0 0.0
      %412 = vmatpush1.msra.mxu0 0.0
      %413 = vmatprep.subr.mxu0 0.0
      %414 = vmatpush1.msra.mxu0 0.0
      %415 = vmatprep.subr.mxu0 0.0
      %416 = vmatpush1.msra.mxu0 0.0
      %417 = vmatprep.subr.mxu0 0.0
      %418 = vmatpush1.msra.mxu0 0.0
      %419 = vmatprep.subr.mxu0 0.0
      %420 = vmatpush1.msra.mxu0 0.0
      %421 = vmatprep.subr.mxu0 0.0
      %422 = vmatpush1.msra.mxu0 0.0
      %423 = vmatprep.subr.mxu0 0.0
      %424 = vmatpush1.msra.mxu0 %v320
      %425 = vmatprep.subr.mxu0 0.0
      %426 = vmatpush1.msra.mxu0 %v308
      %427 = vmatprep.subr.mxu0 0.0
      %428 = vmatpush1.msra.mxu0 %v296
      %429 = vmatprep.subr.mxu0 0.0
      %430 = vmatpush1.msra.mxu0 %v284
      %431 = vmatprep.subr.mxu0 0.0
      %432 = vmatpush1.msra.mxu0 %v272
      %433 = vmatprep.subr.mxu0 0.0
      %434 = vmatpush1.msra.mxu0 %v260
      %435 = vmatprep.subr.mxu0 0.0
      %436 = vmatpush1.msra.mxu0 %v248
      %437 = vmatprep.subr.mxu0 0.0
      %438 = vmatpush1.msra.mxu0 %v236
      %439 = vmatprep.subr.mxu0 0.0
      %440 = vmatpush1.msra.mxu0 %v227
      %441 = vmatprep.subr.mxu0 0.0
      %442 = vmatpush2.msra.mxu0 0.0
      %443 = vmatprep.subr.mxu0 0.0
      %444 = vmatpush2.msra.mxu0 0.0
      %445 = vmatprep.subr.mxu0 0.0
      %446 = vmatpush2.msra.mxu0 0.0
      %447 = vmatprep.subr.mxu0 0.0
      %448 = vmatpush2.msra.mxu0 0.0
      %449 = vmatprep.subr.mxu0 0.0
      %450 = vmatpush2.msra.mxu0 0.0
      %451 = vmatprep.subr.mxu0 0.0
      %452 = vmatpush2.msra.mxu0 0.0
      %453 = vmatprep.subr.mxu0 0.0
      %454 = vmatpush2.msra.mxu0 0.0
      %455 = vmatprep.subr.mxu0 0.0
      %456 = vmatpush2.msra.mxu0 0.0
      %457 = vmatprep.subr.mxu0 0.0
      %458 = vmatpush2.msra.mxu0 0.0
      %459 = vmatprep.subr.mxu0 0.0
      %460 = vmatpush2.msra.mxu0 0.0
      %461 = vmatprep.subr.mxu0 0.0
      %462 = vmatpush2.msra.mxu0 0.0
      %463 = vmatprep.subr.mxu0 0.0
      %464 = vmatpush2.msra.mxu0 0.0
      %465 = vmatprep.subr.mxu0 0.0
      %466 = vmatpush2.msra.mxu0 0.0
      %467 = vmatprep.subr.mxu0 0.0
      %468 = vmatpush2.msra.mxu0 0.0
      %469 = vmatprep.subr.mxu0 0.0
      %470 = vmatpush2.msra.mxu0 0.0
      %471 = vmatprep.subr.mxu0 0.0
      %472 = vmatpush2.msra.mxu0 0.0
      %473 = vmatprep.mubr.f32.mxu0 0.0
      %474 = vmatmul.mubr.f32.gmra.mxu0 %v336
      %v475 = vpop.f32.mrf.mxu0
      %v476 = vadd.f32 %v332, %v475
      %v477 = vpop.f32.mrf.mxu0
      %478 = vdwg.mxu0
      %v479 = vmax.f32 %v405, 0.0
      %v480 = vmax.f32 %v407, 0.0
      %v481 = vmax.f32 %v476, 0.0
      %v482 = vlaneseq
      %v483 = vand.u32 %v482, 127
      %v484 = vadd.s32 %v483, 128
      %v485 = vadd.s32 %v483, 256
      %vm486 = vcmp.lt.s32.totalorder %v483, 0
      %v487 = vsub.s32 0, %v483
      %v488 = vsel %vm486, %v487, %v483
      %v489 = vmul.u32.u64.compose %v488, 3817748708
      %v490 = vextract.low.u32 %v489
      %v491 = vextract.high.u32 %v489
      %v492 = vshrl.u32 %v491, 4
      %v493 = vmul.u32 %v492, 18
      %v494 = vsub.s32 %v488, %v493
      %v495 = vsub.s32 0, %v494
      %v496 = vsel %vm486, %v495, %v494
      %vm497 = vcmp.lt.s32.totalorder %v484, 0
      %v498 = vsub.s32 0, %v484
      %v499 = vsel %vm497, %v498, %v484
      %v500 = vmul.u32.u64.compose %v499, 3817748708
      %v501 = vextract.low.u32 %v500
      %v502 = vextract.high.u32 %v500
      %v503 = vshrl.u32 %v502, 4
      %v504 = vmul.u32 %v503, 18
      %v505 = vsub.s32 %v499, %v504
      %v506 = vsub.s32 0, %v505
      %v507 = vsel %vm497, %v506, %v505
      %vm508 = vcmp.lt.s32.totalorder %v485, 0
      %v509 = vsub.s32 0, %v485
      %v510 = vsel %vm508, %v509, %v485
      %v511 = vmul.u32.u64.compose %v510, 3817748708
      %v512 = vextract.low.u32 %v511
      %v513 = vextract.high.u32 %v511
      %v514 = vshrl.u32 %v513, 4
      %v515 = vmul.u32 %v514, 18
      %v516 = vsub.s32 %v510, %v515
      %v517 = vsub.s32 0, %v516
      %v518 = vsel %vm508, %v517, %v516
      %vm519 = vcmp.ne.s32.totalorder %v496, 0
      %vm520 = vcmp.ne.s32.totalorder %v507, 0
      %vm521 = vcmp.ne.s32.totalorder %v518, 0
      %vm522 = vcmp.lt.s32.totalorder %v496, 0
      %vm523 = vcmp.lt.s32.totalorder %v507, 0
      %vm524 = vcmp.lt.s32.totalorder %v518, 0
      %vm525 = vmand %vm522, %vm519
      %vm526 = vmand %vm523, %vm520
      %vm527 = vmand %vm524, %vm521
      %v528 = vadd.s32 %v496, 18
      %v529 = vadd.s32 %v507, 18
      %v530 = vadd.s32 %v518, 18
      %v531 = vsel %vm525, %v528, %v496
      %v532 = vsel %vm526, %v529, %v507
      %v533 = vsel %vm527, %v530, %v518
      %vm534 = vcmp.lt.s32.totalorder %v531, 16
      %vm535 = vcmp.lt.s32.totalorder %v532, 16
      %vm536 = vcmp.lt.s32.totalorder %v533, 16
      %v537 = vsel %vm534, %v479, 0.0
      %v538 = vsel %vm535, %v480, 0.0
      %v539 = vsel %vm536, %v481, 0.0
      %543 = vrot.lane.b32.xlu0 %v537, 19
      %v544 = vpop.permute.xlu0 %543
      %545 = vrot.lane.b32.xlu0 %v538, 19
      %v546 = vpop.permute.xlu0 %545
      %547 = vrot.lane.b32.xlu0 %v539, 19
      %v548 = vpop.permute.xlu0 %547
      %vm549 = vcmask 154624
      %v550 = vsel %vm549, %v544, %v546
      %v551 = vsel %vm549, %v546, %v548
      %v555 = vsel %vm549, 0.0, %v544
      %vm556 = vcmask 416768
      %v557 = vsel %vm556, %v551, 0.0
      %560 = vrot.lane.b32.xlu0 %v555, 127
      %v561 = vpop.permute.xlu0 %560
      %562 = vrot.lane.b32.xlu0 %v550, 127
      %v563 = vpop.permute.xlu0 %562
      %564 = vrot.lane.b32.xlu0 %v557, 127
      %v565 = vpop.permute.xlu0 %564
      %v566 = vsel %vm237, %v561, %v563
      %v567 = vsel %vm237, %v563, %v565
      %571 = vrot.lane.b32.xlu0 %v555, 126
      %v572 = vpop.permute.xlu0 %571
      %573 = vrot.lane.b32.xlu0 %v550, 126
      %v574 = vpop.permute.xlu0 %573
      %575 = vrot.lane.b32.xlu0 %v557, 126
      %v576 = vpop.permute.xlu0 %575
      %v577 = vsel %vm249, %v572, %v574
      %v578 = vsel %vm249, %v574, %v576
      %582 = vrot.lane.b32.xlu0 %v555, 110
      %v583 = vpop.permute.xlu0 %582
      %584 = vrot.lane.b32.xlu0 %v550, 110
      %v585 = vpop.permute.xlu0 %584
      %586 = vrot.lane.b32.xlu0 %v557, 110
      %v587 = vpop.permute.xlu0 %586
      %v588 = vsel %vm261, %v583, %v585
      %v589 = vsel %vm261, %v585, %v587
      %593 = vrot.lane.b32.xlu0 %v555, 109
      %v594 = vpop.permute.xlu0 %593
      %595 = vrot.lane.b32.xlu0 %v550, 109
      %v596 = vpop.permute.xlu0 %595
      %597 = vrot.lane.b32.xlu0 %v557, 109
      %v598 = vpop.permute.xlu0 %597
      %v599 = vsel %vm273, %v594, %v596
      %v600 = vsel %vm273, %v596, %v598
      %604 = vrot.lane.b32.xlu0 %v555, 108
      %v605 = vpop.permute.xlu0 %604
      %606 = vrot.lane.b32.xlu0 %v550, 108
      %v607 = vpop.permute.xlu0 %606
      %608 = vrot.lane.b32.xlu0 %v557, 108
      %v609 = vpop.permute.xlu0 %608
      %v610 = vsel %vm285, %v605, %v607
      %v611 = vsel %vm285, %v607, %v609
      %615 = vrot.lane.b32.xlu0 %v555, 92
      %v616 = vpop.permute.xlu0 %615
      %617 = vrot.lane.b32.xlu0 %v550, 92
      %v618 = vpop.permute.xlu0 %617
      %619 = vrot.lane.b32.xlu0 %v557, 92
      %v620 = vpop.permute.xlu0 %619
      %v621 = vsel %vm297, %v616, %v618
      %v622 = vsel %vm297, %v618, %v620
      %626 = vrot.lane.b32.xlu0 %v555, 91
      %v627 = vpop.permute.xlu0 %626
      %628 = vrot.lane.b32.xlu0 %v550, 91
      %v629 = vpop.permute.xlu0 %628
      %630 = vrot.lane.b32.xlu0 %v557, 91
      %v631 = vpop.permute.xlu0 %630
      %v632 = vsel %vm309, %v627, %v629
      %v633 = vsel %vm309, %v629, %v631
      %637 = vrot.lane.b32.xlu0 %v555, 90
      %v638 = vpop.permute.xlu0 %637
      %639 = vrot.lane.b32.xlu0 %v550, 90
      %v640 = vpop.permute.xlu0 %639
      %641 = vrot.lane.b32.xlu0 %v557, 90
      %v642 = vpop.permute.xlu0 %641
      %v643 = vsel %vm321, %v638, %v640
      %v644 = vsel %vm321, %v640, %v642
      %v648 = vld [vmem:[%s3] sm:$0xff]
      %v650 = vsel %vm334, %v648, 0
      %652 = vmatprep.subr.mxu0 0.0
      %653 = vmatpush1.msra.mxu0 0.0
      %654 = vmatprep.subr.mxu0 0.0
      %655 = vmatpush1.msra.mxu0 0.0
      %656 = vmatprep.subr.mxu0 0.0
      %657 = vmatpush1.msra.mxu0 0.0
      %658 = vmatprep.subr.mxu0 0.0
      %659 = vmatpush1.msra.mxu0 0.0
      %660 = vmatprep.subr.mxu0 0.0
      %661 = vmatpush1.msra.mxu0 0.0
      %662 = vmatprep.subr.mxu0 0.0
      %663 = vmatpush1.msra.mxu0 0.0
      %664 = vmatprep.subr.mxu0 0.0
      %665 = vmatpush1.msra.mxu0 0.0
      %666 = vmatprep.subr.mxu0 %v644
      %667 = vmatpush1.msra.mxu0 %v643
      %668 = vmatprep.subr.mxu0 %v633
      %669 = vmatpush1.msra.mxu0 %v632
      %670 = vmatprep.subr.mxu0 %v622
      %671 = vmatpush1.msra.mxu0 %v621
      %672 = vmatprep.subr.mxu0 %v611
      %673 = vmatpush1.msra.mxu0 %v610
      %674 = vmatprep.subr.mxu0 %v600
      %675 = vmatpush1.msra.mxu0 %v599
      %676 = vmatprep.subr.mxu0 %v589
      %677 = vmatpush1.msra.mxu0 %v588
      %678 = vmatprep.subr.mxu0 %v578
      %679 = vmatpush1.msra.mxu0 %v577
      %680 = vmatprep.subr.mxu0 %v567
      %681 = vmatpush1.msra.mxu0 %v566
      %682 = vmatprep.subr.mxu0 %v550
      %683 = vmatpush1.msra.mxu0 %v555
      %684 = vmatprep.subr.mxu0 0.0
      %685 = vmatpush2.msra.mxu0 0.0
      %686 = vmatprep.subr.mxu0 0.0
      %687 = vmatpush2.msra.mxu0 0.0
      %688 = vmatprep.subr.mxu0 0.0
      %689 = vmatpush2.msra.mxu0 0.0
      %690 = vmatprep.subr.mxu0 0.0
      %691 = vmatpush2.msra.mxu0 0.0
      %692 = vmatprep.subr.mxu0 0.0
      %693 = vmatpush2.msra.mxu0 0.0
      %694 = vmatprep.subr.mxu0 0.0
      %695 = vmatpush2.msra.mxu0 0.0
      %696 = vmatprep.subr.mxu0 0.0
      %697 = vmatpush2.msra.mxu0 0.0
      %698 = vmatprep.subr.mxu0 0.0
      %699 = vmatpush2.msra.mxu0 0.0
      %700 = vmatprep.subr.mxu0 0.0
      %701 = vmatpush2.msra.mxu0 0.0
      %702 = vmatprep.subr.mxu0 0.0
      %703 = vmatpush2.msra.mxu0 0.0
      %704 = vmatprep.subr.mxu0 0.0
      %705 = vmatpush2.msra.mxu0 0.0
      %706 = vmatprep.subr.mxu0 0.0
      %707 = vmatpush2.msra.mxu0 0.0
      %708 = vmatprep.subr.mxu0 0.0
      %709 = vmatpush2.msra.mxu0 0.0
      %710 = vmatprep.subr.mxu0 0.0
      %711 = vmatpush2.msra.mxu0 0.0
      %712 = vmatprep.subr.mxu0 0.0
      %713 = vmatpush2.msra.mxu0 0.0
      %714 = vmatprep.subr.mxu0 0.0
      %715 = vmatpush2.msra.mxu0 0.0
      %716 = vmatprep.mubr.f32.mxu0 0.0
      %717 = vmatmul.mubr.f32.gmra.mxu0 %v650
      %v718 = vpop.f32.mrf.mxu0
      %v719 = vadd.f32 0.0, %v718
      %v720 = vpop.f32.mrf.mxu0
      %v721 = vadd.f32 0.0, %v720
      %722 = vdwg.mxu0
      %723 = vmatprep.subr.mxu0 0.0
      %724 = vmatpush1.msra.mxu0 0.0
      %725 = vmatprep.subr.mxu0 0.0
      %726 = vmatpush1.msra.mxu0 0.0
      %727 = vmatprep.subr.mxu0 0.0
      %728 = vmatpush1.msra.mxu0 0.0
      %729 = vmatprep.subr.mxu0 0.0
      %730 = vmatpush1.msra.mxu0 0.0
      %731 = vmatprep.subr.mxu0 0.0
      %732 = vmatpush1.msra.mxu0 0.0
      %733 = vmatprep.subr.mxu0 0.0
      %734 = vmatpush1.msra.mxu0 0.0
      %735 = vmatprep.subr.mxu0 0.0
      %736 = vmatpush1.msra.mxu0 0.0
      %737 = vmatprep.subr.mxu0 0.0
      %738 = vmatpush1.msra.mxu0 %v642
      %739 = vmatprep.subr.mxu0 0.0
      %740 = vmatpush1.msra.mxu0 %v631
      %741 = vmatprep.subr.mxu0 0.0
      %742 = vmatpush1.msra.mxu0 %v620
      %743 = vmatprep.subr.mxu0 0.0
      %744 = vmatpush1.msra.mxu0 %v609
      %745 = vmatprep.subr.mxu0 0.0
      %746 = vmatpush1.msra.mxu0 %v598
      %747 = vmatprep.subr.mxu0 0.0
      %748 = vmatpush1.msra.mxu0 %v587
      %749 = vmatprep.subr.mxu0 0.0
      %750 = vmatpush1.msra.mxu0 %v576
      %751 = vmatprep.subr.mxu0 0.0
      %752 = vmatpush1.msra.mxu0 %v565
      %753 = vmatprep.subr.mxu0 0.0
      %754 = vmatpush1.msra.mxu0 %v557
      %755 = vmatprep.subr.mxu0 0.0
      %756 = vmatpush2.msra.mxu0 0.0
      %757 = vmatprep.subr.mxu0 0.0
      %758 = vmatpush2.msra.mxu0 0.0
      %759 = vmatprep.subr.mxu0 0.0
      %760 = vmatpush2.msra.mxu0 0.0
      %761 = vmatprep.subr.mxu0 0.0
      %762 = vmatpush2.msra.mxu0 0.0
      %763 = vmatprep.subr.mxu0 0.0
      %764 = vmatpush2.msra.mxu0 0.0
      %765 = vmatprep.subr.mxu0 0.0
      %766 = vmatpush2.msra.mxu0 0.0
      %767 = vmatprep.subr.mxu0 0.0
      %768 = vmatpush2.msra.mxu0 0.0
      %769 = vmatprep.subr.mxu0 0.0
      %770 = vmatpush2.msra.mxu0 0.0
      %771 = vmatprep.subr.mxu0 0.0
      %772 = vmatpush2.msra.mxu0 0.0
      %773 = vmatprep.subr.mxu0 0.0
      %774 = vmatpush2.msra.mxu0 0.0
      %775 = vmatprep.subr.mxu0 0.0
      %776 = vmatpush2.msra.mxu0 0.0
      %777 = vmatprep.subr.mxu0 0.0
      %778 = vmatpush2.msra.mxu0 0.0
      %779 = vmatprep.subr.mxu0 0.0
      %780 = vmatpush2.msra.mxu0 0.0
      %781 = vmatprep.subr.mxu0 0.0
      %782 = vmatpush2.msra.mxu0 0.0
      %783 = vmatprep.subr.mxu0 0.0
      %784 = vmatpush2.msra.mxu0 0.0
      %785 = vmatprep.subr.mxu0 0.0
      %786 = vmatpush2.msra.mxu0 0.0
      %787 = vmatprep.mubr.f32.mxu0 0.0
      %788 = vmatmul.mubr.f32.gmra.mxu0 %v650
      %v789 = vpop.f32.mrf.mxu0
      %v790 = vadd.f32 0.0, %v789
      %v791 = vpop.f32.mrf.mxu0
      %792 = vdwg.mxu0
      %v793 = vld [vmem:[#allocation2] sm:$0x1]
      %795 = vset.pattern.permute.xlu0 0
      %796 = vperm.xlu0 %795, %v793
      %v797 = vpop.permute.xlu0 %796
      %v799 = vlaneseq
      %v800 = vshrl.u32 %v799, 7
      %v801 = vsub.s32 0, %v800
      %v802 = vrot.slane %v797, %v801
      %v803 = vadd.f32 %v719, %v802
      %v804 = vadd.f32 %v721, %v802
      %v805 = vadd.f32 %v790, %v802
      %v806 = vxor.u32 %v803, 2147483648
      %v807 = vxor.u32 %v804, 2147483648
      %v808 = vxor.u32 %v805, 2147483648
      %v809 = vmul.f32 %v806, 1.442695
      %v810 = vpow.pop %v809
      %v811 = vmul.f32 %v807, 1.442695
      %v812 = vpow.pop %v811
      %v813 = vmul.f32 %v808, 1.442695
      %v814 = vpow.pop %v813
      %v815 = vadd.f32 %v810, 1.0
      %v816 = vadd.f32 %v812, 1.0
      %v817 = vadd.f32 %v814, 1.0
      %v818 = vrcp.pop %v815
      %v819 = vmul.f32 1.0, %v818
      %v820 = vrcp.pop %v816
      %v821 = vmul.f32 1.0, %v820
      %v822 = vrcp.pop %v817
      %v823 = vmul.f32 1.0, %v822
      %v827 = vcombine.low %v819, %v821
      %v829 = vunpack.c.l.s4 1966171168
      %v830 = vunpack.c.0.s8 %v829
      %v831 = vlaneseq
      %v832 = vshrl.u32 %v831, 7
      %v833 = vsub.s32 %v830, %v832
      %v834 = vrot.slane %v827, %v833
      %v836 = vunpack.c.l.s4 1966171168
      %v837 = vunpack.c.0.s8 %v836
      %v838 = vlaneseq
      %v839 = vshrl.u32 %v838, 7
      %v840 = vsub.s32 %v837, %v839
      %v841 = vrot.slane %v823, %v840
      %v842 = vcombine.low %v834, %v841
      %v844 = vunpack.c.l.s4 1966171168
      %v845 = vunpack.c.0.s8 %v844
      %v846 = vlaneseq
      %v847 = vshrl.u32 %v846, 7
      %v848 = vsub.s32 %v845, %v847
      %v849 = vrot.slane %v842, %v848
      %v851 = vlaneseq
      %vm852 = vcmp.ge.s32.totalorder %v851, 0
      %vm853 = vcmp.lt.s32.totalorder %v851, 288
      %vm854 = vmand %vm852, %vm853
      %855 = vst.msk [vmem:[%s224] sm:$0x7] %vm854, %v849
      %p856 = scmp.lt.s32.totalorder %s18, 1
      %s857 = scalar_select %p856, %s18, 1
      %s858 = smul.addr %s857, 3
      %s859 = scalar_lea.vmem %s5, %s858
      // Predicated region
      $region41: #{spatial_attention_forward.3} parent=39 // pred_check
        %p860 = pneg %p146
      $region42: #{spatial_attention_forward.3} parent=39 // pred_check_branch
        %862 = sbr.rel (%p860) target = $region44
      $region43: #{spatial_attention_forward.3} parent=39 // pred_region
        _
      $region44: #{spatial_attention_forward.3} parent=39 // pred_fallthru
        _
    $region40: #{spatial_attention_forward.3} parent=5 // pred_fallthru
      _
    %p863 = scmp.le.s32.totalorder 2, %s13
    // Predicated region
    $region45: #{spatial_attention_forward.3} parent=5 // pred_check
      %p864 = pneg %p863
    $region46: #{spatial_attention_forward.3} parent=5 // pred_check_branch
      %866 = sbr.rel (%p864) target = $region48
    $region47: #{spatial_attention_forward.3} parent=5 // pred_region
      %s867 = ssub.s32 %s13, 2
      // Predicated region
      $region49: #{spatial_attention_forward.3} parent=47 // pred_check
        %p868 = pneg %p152
      $region50: #{spatial_attention_forward.3} parent=47 // pred_check_branch
        %870 = sbr.rel (%p868) target = $region52
      $region51: #{spatial_attention_forward.3} parent=47 // pred_region
        %p871 = scmp.lt.s32.totalorder %s19, 1
        %s872 = scalar_select %p871, %s19, 1
        %s873 = smul.addr %s872, 3
        %s874 = scalar_lea.vmem %s5, %s873
      $region52: #{spatial_attention_forward.3} parent=47 // pred_fallthru
        _
    $region48: #{spatial_attention_forward.3} parent=5 // pred_fallthru
      _
  $region6: #{spatial_attention_forward.3} parent=0 // loop_footer
    %s17 = sadd.s32 1, %s13
  $region7: #{spatial_attention_forward.3} parent=0 // loop_footer_branch
    %12 = sbr.rel target = $region3
  $region8: #{spatial_attention_forward.3} parent=0 // loop_exit
    _

</llo_original>
